<compile_context>
chip_gen: v7x
topology: tpu7x:2x2x1
jax: 0.10.0
libtpu: 0.0.40
codegen_flags: <defaults>
</compile_context>

<pallas_src>
import math

import jax
import jax.numpy as jnp
from jax.experimental import pallas as pl
from jax.experimental.pallas import tpu as pltpu

NUM_CLASSES = 10
PADDED_CLASSES = 128   # lane-dense output slab (avoids masked vst + near-empty MXU columns)
NEG_BIG = -1e30        # pad-column logit bias; exp(pad - max) underflows to exactly 0


def _round_up(a, m):
    return ((a + m - 1) // m) * m


def mlp_softmax_kernel(x_ref, w1_ref, b1_ref, w2_ref, b2_ref, w3_ref, b3_ref, o_ref):
    # Layer 1: Linear(784, 512) + ReLU  (bf16 MXU inputs, f32 accumulation)
    h1 = jnp.dot(x_ref[...], w1_ref[...], preferred_element_type=jnp.float32)
    h1 = jnp.maximum(h1 + b1_ref[...], 0.0).astype(jnp.bfloat16)
    # Layer 2: Linear(512, 128) + ReLU
    h2 = jnp.dot(h1, w2_ref[...], preferred_element_type=jnp.float32)
    h2 = jnp.maximum(h2 + b2_ref[...], 0.0).astype(jnp.bfloat16)
    # Layer 3: Linear(128, 128-padded classes); pad columns carry a huge negative bias.
    logits = jnp.dot(h2, w3_ref[...], preferred_element_type=jnp.float32) + b3_ref[...]
    # Numerically stable softmax over the padded class axis (pad columns contribute exp == 0).
    m = jnp.max(logits, axis=-1, keepdims=True)
    e = jnp.exp(logits - m)
    denom = jnp.sum(e, axis=-1, keepdims=True)
    o_ref[...] = (e * pl.reciprocal(denom, approx=True)).astype(o_ref.dtype)


def mnist_net_forward(x, params, *, block_b=256):
    w1, b1, w2, b2, w3, b3 = params
    B, K = x.shape

    # ---- wrapper-side layout prep (bf16 weights, class-dim padding, batch padding) ----
    xb = x.astype(jnp.bfloat16)
    w1b = w1.astype(jnp.bfloat16)
    w2b = w2.astype(jnp.bfloat16)
    w3p = (jnp.zeros((w3.shape[0], PADDED_CLASSES), jnp.bfloat16)
           .at[:, :NUM_CLASSES].set(w3.astype(jnp.bfloat16)))
    b3p = (jnp.full((1, PADDED_CLASSES), NEG_BIG, jnp.float32)
           .at[:, :NUM_CLASSES].set(b3))

    tb = min(block_b, _round_up(B, 8))      # batch tile, multiple of 8 (sublane)
    Bp = _round_up(B, tb)
    if Bp != B:
        xb = jnp.pad(xb, ((0, Bp - B), (0, 0)))
    grid = (Bp // tb,)

    flops = 2 * Bp * (K * 512 + 512 * 128 + 128 * PADDED_CLASSES)
    transcendentals = Bp * (PADDED_CLASSES + 1)                  # exp + reciprocal
    bytes_accessed = (xb.size * 2 + w1b.size * 2 + w2b.size * 2 + w3p.size * 2
                      + b1.size * 4 + b2.size * 4 + b3p.size * 4
                      + Bp * PADDED_CLASSES * 4)

    out = pl.pallas_call(
        mlp_softmax_kernel,
        out_shape=jax.ShapeDtypeStruct((Bp, PADDED_CLASSES), jnp.float32),
        grid=grid,
        in_specs=[
            pl.BlockSpec((tb, K), lambda i: (i, 0)),          # x: streamed per batch tile
            pl.BlockSpec(w1b.shape, lambda i: (0, 0)),        # weights/biases: resident
            pl.BlockSpec(b1.shape, lambda i: (0, 0)),
            pl.BlockSpec(w2b.shape, lambda i: (0, 0)),
            pl.BlockSpec(b2.shape, lambda i: (0, 0)),
            pl.BlockSpec(w3p.shape, lambda i: (0, 0)),
            pl.BlockSpec(b3p.shape, lambda i: (0, 0)),
        ],
        out_specs=pl.BlockSpec((tb, PADDED_CLASSES), lambda i: (i, 0)),
        compiler_params=pltpu.CompilerParams(
            dimension_semantics=("parallel",),                # batch axis split across TCs (v7x)
            vmem_limit_bytes=32 << 20,
        ),
        cost_estimate=pl.CostEstimate(
            flops=flops, transcendentals=transcendentals, bytes_accessed=bytes_accessed),
    )(xb, w1b, b1, w2b, b2, w3p, b3p)

    return out[:B, :NUM_CLASSES]


def init_params(key):
    # Deterministic init mimicking PyTorch nn.Linear default: U(-1/sqrt(fan_in), 1/sqrt(fan_in)).
    dims = [(784, 512), (512, 128), (128, NUM_CLASSES)]
    params = []
    for (fan_in, fan_out) in dims:
        key, kw, kb = jax.random.split(key, 3)
        bound = 1.0 / math.sqrt(fan_in)
        w = jax.random.uniform(kw, (fan_in, fan_out), jnp.float32, -bound, bound)
        b = jax.random.uniform(kb, (1, fan_out), jnp.float32, -bound, bound)
        params.extend([w, b])
    return tuple(params)


def reference_forward(x, params):
    # Mirrors the kernel's bf16 quantization of matmul inputs (f32 accumulation, f32 biases).
    w1, b1, w2, b2, w3, b3 = params
    q = lambda a: a.astype(jnp.bfloat16).astype(jnp.float32)
    h1 = jnp.maximum(q(x) @ q(w1) + b1, 0.0)
    h2 = jnp.maximum(q(h1) @ q(w2) + b2, 0.0)
    logits = q(h2) @ q(w3) + b3
    return jax.nn.softmax(logits, axis=1)


if __name__ == "__main__":
    key = jax.random.PRNGKey(0)
    key, kx = jax.random.split(key)
    batch = 8
    x = jax.random.normal(kx, (batch, 784), jnp.float32)
    params = init_params(key)

    out = mnist_net_forward(x, params)
    out = jax.block_until_ready(out)

    ref = reference_forward(x, params)
    assert out.shape == (batch, NUM_CLASSES)
    assert jnp.allclose(out, ref, atol=5e-3, rtol=0), "Pallas output mismatch vs reference"
    assert jnp.allclose(jnp.sum(out, axis=1), 1.0, atol=5e-3), "Softmax rows must sum to 1"
    print("KERNEL_OK")
</pallas_src>

<mosaic_0001>
module attributes {stable_mosaic.version = 11 : i64} {
  func.func @mlp_softmax_kernel(%arg0: i32, %arg1: memref<8x784xbf16, #tpu.memory_space<vmem>>, %arg2: memref<784x512xbf16, #tpu.memory_space<vmem>>, %arg3: memref<1x512xf32, #tpu.memory_space<vmem>>, %arg4: memref<512x128xbf16, #tpu.memory_space<vmem>>, %arg5: memref<1x128xf32, #tpu.memory_space<vmem>>, %arg6: memref<128x128xbf16, #tpu.memory_space<vmem>>, %arg7: memref<1x128xf32, #tpu.memory_space<vmem>>, %arg8: memref<8x128xf32, #tpu.memory_space<vmem>>) attributes {dimension_semantics = [#tpu.dimension_semantics<parallel>], iteration_bounds = array<i64: 1>, scalar_prefetch = 0 : i64, scratch_operands = 0 : i64, tpu.core_type = #tpu.core_type<tc>, window_params = [{transform_indices = @transform_0, window_bounds = array<i64: 8, 784>}, {pipeline_mode = #tpu.pipeline_mode<synchronous>, transform_indices = @transform_1, window_bounds = array<i64: 784, 512>}, {pipeline_mode = #tpu.pipeline_mode<synchronous>, transform_indices = @transform_2, window_bounds = array<i64: 1, 512>}, {pipeline_mode = #tpu.pipeline_mode<synchronous>, transform_indices = @transform_3, window_bounds = array<i64: 512, 128>}, {pipeline_mode = #tpu.pipeline_mode<synchronous>, transform_indices = @transform_4, window_bounds = array<i64: 1, 128>}, {pipeline_mode = #tpu.pipeline_mode<synchronous>, transform_indices = @transform_5, window_bounds = array<i64: 128, 128>}, {pipeline_mode = #tpu.pipeline_mode<synchronous>, transform_indices = @transform_6, window_bounds = array<i64: 1, 128>}, {transform_indices = @transform_7, window_bounds = array<i64: 8, 128>}]} {
    %c0 = arith.constant 0 : index
    %c0_0 = arith.constant 0 : index
    %0 = vector.load %arg1[%c0, %c0_0] : memref<8x784xbf16, #tpu.memory_space<vmem>>, vector<8x784xbf16>
    %c0_1 = arith.constant 0 : index
    %c0_2 = arith.constant 0 : index
    %1 = vector.load %arg2[%c0_1, %c0_2] : memref<784x512xbf16, #tpu.memory_space<vmem>>, vector<784x512xbf16>
    %cst = arith.constant dense<0.000000e+00> : vector<8x512xf32>
    %2 = tpu.matmul %0, %1, %cst {dimension_numbers = #tpu.dot_dimension_numbers<[1], [0], [0], [1], [0, 0, 1, 1], [], []>} : vector<8x784xbf16>, vector<784x512xbf16>, vector<8x512xf32> -> vector<8x512xf32>
    %c0_3 = arith.constant 0 : index
    %c0_4 = arith.constant 0 : index
    %3 = vector.load %arg3[%c0_3, %c0_4] : memref<1x512xf32, #tpu.memory_space<vmem>>, vector<1x512xf32>
    %4 = vector.broadcast %3 : vector<1x512xf32> to vector<8x512xf32>
    %5 = arith.addf %2, %4 : vector<8x512xf32>
    %cst_5 = arith.constant 0.000000e+00 : f32
    %6 = vector.broadcast %cst_5 : f32 to vector<8x512xf32>
    %7 = arith.maximumf %5, %6 : vector<8x512xf32>
    %8 = arith.truncf %7 : vector<8x512xf32> to vector<8x512xbf16>
    %c0_6 = arith.constant 0 : index
    %c0_7 = arith.constant 0 : index
    %9 = vector.load %arg4[%c0_6, %c0_7] : memref<512x128xbf16, #tpu.memory_space<vmem>>, vector<512x128xbf16>
    %cst_8 = arith.constant dense<0.000000e+00> : vector<8x128xf32>
    %10 = tpu.matmul %8, %9, %cst_8 {dimension_numbers = #tpu.dot_dimension_numbers<[1], [0], [0], [1], [0, 0, 1, 1], [], []>} : vector<8x512xbf16>, vector<512x128xbf16>, vector<8x128xf32> -> vector<8x128xf32>
    %c0_9 = arith.constant 0 : index
    %c0_10 = arith.constant 0 : index
    %11 = vector.load %arg5[%c0_9, %c0_10] : memref<1x128xf32, #tpu.memory_space<vmem>>, vector<1x128xf32>
    %12 = vector.broadcast %11 : vector<1x128xf32> to vector<8x128xf32>
    %13 = arith.addf %10, %12 : vector<8x128xf32>
    %cst_11 = arith.constant 0.000000e+00 : f32
    %14 = vector.broadcast %cst_11 : f32 to vector<8x128xf32>
    %15 = arith.maximumf %13, %14 : vector<8x128xf32>
    %16 = arith.truncf %15 : vector<8x128xf32> to vector<8x128xbf16>
    %c0_12 = arith.constant 0 : index
    %c0_13 = arith.constant 0 : index
    %17 = vector.load %arg6[%c0_12, %c0_13] : memref<128x128xbf16, #tpu.memory_space<vmem>>, vector<128x128xbf16>
    %cst_14 = arith.constant dense<0.000000e+00> : vector<8x128xf32>
    %18 = tpu.matmul %16, %17, %cst_14 {dimension_numbers = #tpu.dot_dimension_numbers<[1], [0], [0], [1], [0, 0, 1, 1], [], []>} : vector<8x128xbf16>, vector<128x128xbf16>, vector<8x128xf32> -> vector<8x128xf32>
    %c0_15 = arith.constant 0 : index
    %c0_16 = arith.constant 0 : index
    %19 = vector.load %arg7[%c0_15, %c0_16] : memref<1x128xf32, #tpu.memory_space<vmem>>, vector<1x128xf32>
    %20 = vector.broadcast %19 : vector<1x128xf32> to vector<8x128xf32>
    %21 = arith.addf %18, %20 : vector<8x128xf32>
    %cst_17 = arith.constant dense<0xFF800000> : vector<8xf32>
    %22 = vector.multi_reduction <maximumf>, %21, %cst_17 [1] : vector<8x128xf32> to vector<8xf32>
    %23 = vector.shape_cast %22 : vector<8xf32> to vector<8x1xf32>
    %24 = vector.broadcast %23 : vector<8x1xf32> to vector<8x128xf32>
    %25 = arith.subf %21, %24 : vector<8x128xf32>
    %26 = math.exp %25 : vector<8x128xf32>
    %cst_18 = arith.constant dense<0.000000e+00> : vector<8xf32>
    %27 = vector.multi_reduction <add>, %26, %cst_18 [1] : vector<8x128xf32> to vector<8xf32>
    %28 = vector.shape_cast %27 : vector<8xf32> to vector<8x1xf32>
    %29 = tpu.reciprocal %28 {approx = true} : vector<8x1xf32> -> vector<8x1xf32>
    %30 = vector.broadcast %29 : vector<8x1xf32> to vector<8x128xf32>
    %31 = arith.mulf %26, %30 : vector<8x128xf32>
    %c0_19 = arith.constant 0 : index
    %c0_20 = arith.constant 0 : index
    %32 = vector.load %arg8[%c0_19, %c0_20] : memref<8x128xf32, #tpu.memory_space<vmem>>, vector<8x128xf32>
    tpu.vector_store %arg8[%c0_19, %c0_20], %31 {strides = array<i32>} : memref<8x128xf32, #tpu.memory_space<vmem>>, vector<8x128xf32>,
    return
  }
  func.func @transform_0(%arg0: i32) -> (i32, i32) {
    %c0_i32 = arith.constant 0 : i32
    %c0_i32_0 = arith.constant 0 : i32
    return %arg0, %c0_i32 : i32, i32
  }
  func.func @transform_1(%arg0: i32) -> (i32, i32) {
    %c0_i32 = arith.constant 0 : i32
    %c0_i32_0 = arith.constant 0 : i32
    %c0_i32_1 = arith.constant 0 : i32
    return %c0_i32, %c0_i32_0 : i32, i32
  }
  func.func @transform_2(%arg0: i32) -> (i32, i32) {
    %c0_i32 = arith.constant 0 : i32
    %c0_i32_0 = arith.constant 0 : i32
    %c0_i32_1 = arith.constant 0 : i32
    return %c0_i32, %c0_i32_0 : i32, i32
  }
  func.func @transform_3(%arg0: i32) -> (i32, i32) {
    %c0_i32 = arith.constant 0 : i32
    %c0_i32_0 = arith.constant 0 : i32
    %c0_i32_1 = arith.constant 0 : i32
    return %c0_i32, %c0_i32_0 : i32, i32
  }
  func.func @transform_4(%arg0: i32) -> (i32, i32) {
    %c0_i32 = arith.constant 0 : i32
    %c0_i32_0 = arith.constant 0 : i32
    %c0_i32_1 = arith.constant 0 : i32
    return %c0_i32, %c0_i32_0 : i32, i32
  }
  func.func @transform_5(%arg0: i32) -> (i32, i32) {
    %c0_i32 = arith.constant 0 : i32
    %c0_i32_0 = arith.constant 0 : i32
    %c0_i32_1 = arith.constant 0 : i32
    return %c0_i32, %c0_i32_0 : i32, i32
  }
  func.func @transform_6(%arg0: i32) -> (i32, i32) {
    %c0_i32 = arith.constant 0 : i32
    %c0_i32_0 = arith.constant 0 : i32
    %c0_i32_1 = arith.constant 0 : i32
    return %c0_i32, %c0_i32_0 : i32, i32
  }
  func.func @transform_7(%arg0: i32) -> (i32, i32) {
    %c0_i32 = arith.constant 0 : i32
    %c0_i32_0 = arith.constant 0 : i32
    return %arg0, %c0_i32 : i32, i32
  }
}

</mosaic_0001>

<llo_original>
// kernel: tpu_custom_call.1
$region0: #{tpu_custom_call.1}
  #allocation0 [shape = 'u32[]', space=smem, size = 0x4, offset = 0x4, fixed_abs, tag = 'smem constant byte address 0x4 - core index']
  #allocation1 [shape = 'u32[144,128]{1,0:T(1,128)}', space=vmem, size = 0x12000, scoped, tag = 'internal scratch']
  %s0 = inlined_call_operand.hbm [shape: bf16[8,784], index: 0, kind: input, shape index: {}]
  %s1 = inlined_call_operand.hbm [shape: bf16[784,512], index: 1, kind: input, shape index: {}]
  %s2 = inlined_call_operand.vmem [shape: f32[1,512], index: 2, kind: input, shape index: {}]
  %s3 = inlined_call_operand.hbm [shape: bf16[512,128], index: 3, kind: input, shape index: {}]
  %s4 = inlined_call_operand.vmem [shape: f32[1,128], index: 4, kind: input, shape index: {}]
  %s5 = inlined_call_operand.hbm [shape: bf16[128,128], index: 5, kind: input, shape index: {}]
  %s6 = inlined_call_operand.vmem [shape: f32[1,128], index: 6, kind: input, shape index: {}]
  %s7 = inlined_call_operand.hbm [shape: f32[8,128], index: 7, kind: output, shape index: {}]
  %s8 = sld [smem:[#allocation0]]
  $region54: #{tpu_custom_call.1} parent=0
    _
  %s10 = ssub.s32 1, %s8
  %s11 = scalar_select 0, %s10, %s8
  $region1: #{tpu_custom_call.1} parent=0
    #allocation2 [shape = 'u8[14336]{0}', space=vmem, size = 0x3800, scoped, tag = 'input window, operand 0, single buffered']
    #allocation3 [shape = 's32[1]{0}', space=sflag, size = 0x4, scoped, tag = 'scoped memory for tpu_custom_call.1']
    #allocation4 [shape = 's32[1]{0}', space=sflag, size = 0x4, scoped, tag = 'scoped memory for tpu_custom_call.1']
    #allocation5 [shape = 'u8[802816]{0}', space=vmem, size = 0xc4000, scoped, tag = 'input window, operand 1, single buffered']
    #allocation6 [shape = 's32[1]{0}', space=sflag, size = 0x4, scoped, tag = 'scoped memory for tpu_custom_call.1']
    #allocation7 [shape = 'u8[131072]{0}', space=vmem, size = 0x20000, scoped, tag = 'input window, operand 3, single buffered']
    #allocation8 [shape = 'u8[32768]{0}', space=vmem, size = 0x8000, scoped, tag = 'input window, operand 5, single buffered']
    #allocation9 [shape = 's32[1]{0}', space=sflag, size = 0x4, scoped, tag = 'scoped memory for tpu_custom_call.1']
    #allocation10 [shape = 'u8[4096]{0}', space=vmem, size = 0x1000, scoped, tag = 'output window, operand 0, single buffered']
    %12 = vsyncpa [#allocation3], 0
    %13 = vsyncpa [#allocation6], 0
    %14 = vsyncpa [#allocation9], 0
    %15 = vsyncpa [#allocation4], 0
    // Predicated region
    $region2: #{tpu_custom_call.1} parent=1 // pred_check
      _
    $region3: #{tpu_custom_call.1} parent=1 // pred_check_branch
      %17 = sbr.rel (0) target = $region5
    $region4: #{tpu_custom_call.1} parent=1 // pred_region
      %s19 = ssub.s32 448, 448
      %20 = vsyncadd [#allocation3], %s19
      %s22 = sshll.u32 [#allocation2], 4
      %s23 = int_to_ptr.vmem [resolvable:$true] %s22
      %25 = dma.hbm_to_vmem [thread:$0]  %s0, 448, %s23, [#allocation3]
    $region5: #{tpu_custom_call.1} parent=1 // pred_fallthru
      _
    // Predicated region
    $region6: #{tpu_custom_call.1} parent=1 // pred_check
      _
    $region7: #{tpu_custom_call.1} parent=1 // pred_check_branch
      %27 = sbr.rel (0) target = $region9
    $region8: #{tpu_custom_call.1} parent=1 // pred_region
      %s29 = ssub.s32 25088, 25088
      %30 = vsyncadd [#allocation6], %s29
      %s31 = sshll.u32 [#allocation5], 4
      %s32 = int_to_ptr.vmem [resolvable:$true] %s31
      %37 = dma.hbm_to_vmem [thread:$0]  %s1, 25088, %s32, [#allocation6], 256, 256, 16
    $region9: #{tpu_custom_call.1} parent=1 // pred_fallthru
      _
    // Predicated region
    $region10: #{tpu_custom_call.1} parent=1 // pred_check
      _
    $region11: #{tpu_custom_call.1} parent=1 // pred_check_branch
      %39 = sbr.rel (0) target = $region13
    $region12: #{tpu_custom_call.1} parent=1 // pred_region
      _
    $region13: #{tpu_custom_call.1} parent=1 // pred_fallthru
      _
    // Predicated region
    $region14: #{tpu_custom_call.1} parent=1 // pred_check
      _
    $region15: #{tpu_custom_call.1} parent=1 // pred_check_branch
      %41 = sbr.rel (0) target = $region17
    $region16: #{tpu_custom_call.1} parent=1 // pred_region
      %s43 = ssub.s32 4096, 4096
      %44 = vsyncadd [#allocation6], %s43
      %s45 = sshll.u32 [#allocation7], 4
      %s46 = int_to_ptr.vmem [resolvable:$true] %s45
      %51 = dma.hbm_to_vmem [thread:$0]  %s3, 4096, %s46, [#allocation6], 64, 64, 4
    $region17: #{tpu_custom_call.1} parent=1 // pred_fallthru
      _
    // Predicated region
    $region18: #{tpu_custom_call.1} parent=1 // pred_check
      _
    $region19: #{tpu_custom_call.1} parent=1 // pred_check_branch
      %53 = sbr.rel (0) target = $region21
    $region20: #{tpu_custom_call.1} parent=1 // pred_region
      _
    $region21: #{tpu_custom_call.1} parent=1 // pred_fallthru
      _
    // Predicated region
    $region22: #{tpu_custom_call.1} parent=1 // pred_check
      _
    $region23: #{tpu_custom_call.1} parent=1 // pred_check_branch
      %55 = sbr.rel (0) target = $region25
    $region24: #{tpu_custom_call.1} parent=1 // pred_region
      %s57 = ssub.s32 1024, 1024
      %58 = vsyncadd [#allocation9], %s57
      %s59 = sshll.u32 [#allocation8], 4
      %s60 = int_to_ptr.vmem [resolvable:$true] %s59
      %65 = dma.hbm_to_vmem [thread:$0]  %s5, 1024, %s60, [#allocation9], 64, 64, 4
    $region25: #{tpu_custom_call.1} parent=1 // pred_fallthru
      _
    // Predicated region
    $region26: #{tpu_custom_call.1} parent=1 // pred_check
      _
    $region27: #{tpu_custom_call.1} parent=1 // pred_check_branch
      %67 = sbr.rel (0) target = $region29
    $region28: #{tpu_custom_call.1} parent=1 // pred_region
      _
    $region29: #{tpu_custom_call.1} parent=1 // pred_fallthru
      _
    // Predicated region
    $region30: #{tpu_custom_call.1} parent=1 // pred_check
      _
    $region31: #{tpu_custom_call.1} parent=1 // pred_check_branch
      %69 = sbr.rel (0) target = $region33
    $region32: #{tpu_custom_call.1} parent=1 // pred_region
      %70 = dma.done [#allocation3], 448
    $region33: #{tpu_custom_call.1} parent=1 // pred_fallthru
      _
    // Predicated region
    $region34: #{tpu_custom_call.1} parent=1 // pred_check
      _
    $region35: #{tpu_custom_call.1} parent=1 // pred_check_branch
      %72 = sbr.rel (0) target = $region37
    $region36: #{tpu_custom_call.1} parent=1 // pred_region
      %73 = dma.done [#allocation6], 25088
    $region37: #{tpu_custom_call.1} parent=1 // pred_fallthru
      _
    // Predicated region
    $region38: #{tpu_custom_call.1} parent=1 // pred_check
      _
    $region39: #{tpu_custom_call.1} parent=1 // pred_check_branch
      %75 = sbr.rel (0) target = $region41
    $region40: #{tpu_custom_call.1} parent=1 // pred_region
      %76 = dma.done [#allocation6], 4096
    $region41: #{tpu_custom_call.1} parent=1 // pred_fallthru
      _
    // Predicated region
    $region42: #{tpu_custom_call.1} parent=1 // pred_check
      _
    $region43: #{tpu_custom_call.1} parent=1 // pred_check_branch
      %78 = sbr.rel (0) target = $region45
    $region44: #{tpu_custom_call.1} parent=1 // pred_region
      %79 = dma.done [#allocation9], 1024
    $region45: #{tpu_custom_call.1} parent=1 // pred_fallthru
      _
    %v81 = vld [vmem:[#allocation2] sm:$0xff]
    %v82 = vld [vmem:[#allocation2 + $0x8] sm:$0xff]
    %v83 = vld [vmem:[#allocation2 + $0x10] sm:$0xff]
    %v84 = vld [vmem:[#allocation2 + $0x18] sm:$0xf]
    %v85 = vld [vmem:[#allocation5] sm:$0xff]
    %v86 = vld [vmem:[#allocation5 + $0x8] sm:$0xff]
    %v87 = vld [vmem:[#allocation5 + $0x10] sm:$0xff]
    %v88 = vld [vmem:[#allocation5 + $0x18] sm:$0xff]
    %v89 = vld [vmem:[#allocation5 + $0x20] sm:$0xff]
    %v90 = vld [vmem:[#allocation5 + $0x28] sm:$0xff]
    %v91 = vld [vmem:[#allocation5 + $0x30] sm:$0xff]
    %v92 = vld [vmem:[#allocation5 + $0x38] sm:$0xff]
    %v93 = vld [vmem:[#allocation5 + $0x40] sm:$0xff]
    %v94 = vld [vmem:[#allocation5 + $0x48] sm:$0xff]
    %v95 = vld [vmem:[#allocation5 + $0x50] sm:$0xff]
    %v96 = vld [vmem:[#allocation5 + $0x58] sm:$0xff]
    %v97 = vld [vmem:[#allocation5 + $0x60] sm:$0xff]
    %v98 = vld [vmem:[#allocation5 + $0x68] sm:$0xff]
    %v99 = vld [vmem:[#allocation5 + $0x70] sm:$0xff]
    %v100 = vld [vmem:[#allocation5 + $0x78] sm:$0xff]
    %v101 = vld [vmem:[#allocation5 + $0x80] sm:$0xff]
    %v102 = vld [vmem:[#allocation5 + $0x88] sm:$0xff]
    %v103 = vld [vmem:[#allocation5 + $0x90] sm:$0xff]
    %v104 = vld [vmem:[#allocation5 + $0x98] sm:$0xff]
    %v105 = vld [vmem:[#allocation5 + $0xa0] sm:$0xff]
    %v106 = vld [vmem:[#allocation5 + $0xa8] sm:$0xff]
    %v107 = vld [vmem:[#allocation5 + $0xb0] sm:$0xff]
    %v108 = vld [vmem:[#allocation5 + $0xb8] sm:$0xff]
    %v109 = vld [vmem:[#allocation5 + $0xc0] sm:$0xff]
    %v110 = vld [vmem:[#allocation5 + $0xc8] sm:$0xff]
    %v111 = vld [vmem:[#allocation5 + $0xd0] sm:$0xff]
    %v112 = vld [vmem:[#allocation5 + $0xd8] sm:$0xff]
    %v113 = vld [vmem:[#allocation5 + $0xe0] sm:$0xff]
    %v114 = vld [vmem:[#allocation5 + $0xe8] sm:$0xff]
    %v115 = vld [vmem:[#allocation5 + $0xf0] sm:$0xff]
    %v116 = vld [vmem:[#allocation5 + $0xf8] sm:$0xff]
    %v117 = vld [vmem:[#allocation5 + $0x100] sm:$0xff]
    %v118 = vld [vmem:[#allocation5 + $0x108] sm:$0xff]
    %v119 = vld [vmem:[#allocation5 + $0x110] sm:$0xff]
    %v120 = vld [vmem:[#allocation5 + $0x118] sm:$0xff]
    %v121 = vld [vmem:[#allocation5 + $0x120] sm:$0xff]
    %v122 = vld [vmem:[#allocation5 + $0x128] sm:$0xff]
    %v123 = vld [vmem:[#allocation5 + $0x130] sm:$0xff]
    %v124 = vld [vmem:[#allocation5 + $0x138] sm:$0xff]
    %v125 = vld [vmem:[#allocation5 + $0x140] sm:$0xff]
    %v126 = vld [vmem:[#allocation5 + $0x148] sm:$0xff]
    %v127 = vld [vmem:[#allocation5 + $0x150] sm:$0xff]
    %v128 = vld [vmem:[#allocation5 + $0x158] sm:$0xff]
    %v129 = vld [vmem:[#allocation5 + $0x160] sm:$0xff]
    %v130 = vld [vmem:[#allocation5 + $0x168] sm:$0xff]
    %v131 = vld [vmem:[#allocation5 + $0x170] sm:$0xff]
    %v132 = vld [vmem:[#allocation5 + $0x178] sm:$0xff]
    %v133 = vld [vmem:[#allocation5 + $0x180] sm:$0xff]
    %v134 = vld [vmem:[#allocation5 + $0x188] sm:$0xff]
    %v135 = vld [vmem:[#allocation5 + $0x190] sm:$0xff]
    %v136 = vld [vmem:[#allocation5 + $0x198] sm:$0xff]
    %v137 = vld [vmem:[#allocation5 + $0x1a0] sm:$0xff]
    %v138 = vld [vmem:[#allocation5 + $0x1a8] sm:$0xff]
    %v139 = vld [vmem:[#allocation5 + $0x1b0] sm:$0xff]
    %v140 = vld [vmem:[#allocation5 + $0x1b8] sm:$0xff]
    %v141 = vld [vmem:[#allocation5 + $0x1c0] sm:$0xff]
    %v142 = vld [vmem:[#allocation5 + $0x1c8] sm:$0xff]
    %v143 = vld [vmem:[#allocation5 + $0x1d0] sm:$0xff]
    %v144 = vld [vmem:[#allocation5 + $0x1d8] sm:$0xff]
    %v145 = vld [vmem:[#allocation5 + $0x1e0] sm:$0xff]
    %v146 = vld [vmem:[#allocation5 + $0x1e8] sm:$0xff]
    %v147 = vld [vmem:[#allocation5 + $0x1f0] sm:$0xff]
    %v148 = vld [vmem:[#allocation5 + $0x1f8] sm:$0xff]
    %v149 = vld [vmem:[#allocation5 + $0x200] sm:$0xff]
    %v150 = vld [vmem:[#allocation5 + $0x208] sm:$0xff]
    %v151 = vld [vmem:[#allocation5 + $0x210] sm:$0xff]
    %v152 = vld [vmem:[#allocation5 + $0x218] sm:$0xff]
    %v153 = vld [vmem:[#allocation5 + $0x220] sm:$0xff]
    %v154 = vld [vmem:[#allocation5 + $0x228] sm:$0xff]
    %v155 = vld [vmem:[#allocation5 + $0x230] sm:$0xff]
    %v156 = vld [vmem:[#allocation5 + $0x238] sm:$0xff]
    %v157 = vld [vmem:[#allocation5 + $0x240] sm:$0xff]
    %v158 = vld [vmem:[#allocation5 + $0x248] sm:$0xff]
    %v159 = vld [vmem:[#allocation5 + $0x250] sm:$0xff]
    %v160 = vld [vmem:[#allocation5 + $0x258] sm:$0xff]
    %v161 = vld [vmem:[#allocation5 + $0x260] sm:$0xff]
    %v162 = vld [vmem:[#allocation5 + $0x268] sm:$0xff]
    %v163 = vld [vmem:[#allocation5 + $0x270] sm:$0xff]
    %v164 = vld [vmem:[#allocation5 + $0x278] sm:$0xff]
    %v165 = vld [vmem:[#allocation5 + $0x280] sm:$0xff]
    %v166 = vld [vmem:[#allocation5 + $0x288] sm:$0xff]
    %v167 = vld [vmem:[#allocation5 + $0x290] sm:$0xff]
    %v168 = vld [vmem:[#allocation5 + $0x298] sm:$0xff]
    %v169 = vld [vmem:[#allocation5 + $0x2a0] sm:$0xff]
    %v170 = vld [vmem:[#allocation5 + $0x2a8] sm:$0xff]
    %v171 = vld [vmem:[#allocation5 + $0x2b0] sm:$0xff]
    %v172 = vld [vmem:[#allocation5 + $0x2b8] sm:$0xff]
    %v173 = vld [vmem:[#allocation5 + $0x2c0] sm:$0xff]
    %v174 = vld [vmem:[#allocation5 + $0x2c8] sm:$0xff]
    %v175 = vld [vmem:[#allocation5 + $0x2d0] sm:$0xff]
    %v176 = vld [vmem:[#allocation5 + $0x2d8] sm:$0xff]
    %v177 = vld [vmem:[#allocation5 + $0x2e0] sm:$0xff]
    %v178 = vld [vmem:[#allocation5 + $0x2e8] sm:$0xff]
    %v179 = vld [vmem:[#allocation5 + $0x2f0] sm:$0xff]
    %v180 = vld [vmem:[#allocation5 + $0x2f8] sm:$0xff]
    %v181 = vld [vmem:[#allocation5 + $0x300] sm:$0xff]
    %v182 = vld [vmem:[#allocation5 + $0x308] sm:$0xff]
    %v183 = vld [vmem:[#allocation5 + $0x310] sm:$0xff]
    %v184 = vld [vmem:[#allocation5 + $0x318] sm:$0xff]
    %v185 = vld [vmem:[#allocation5 + $0x320] sm:$0xff]
    %v186 = vld [vmem:[#allocation5 + $0x328] sm:$0xff]
    %v187 = vld [vmem:[#allocation5 + $0x330] sm:$0xff]
    %v188 = vld [vmem:[#allocation5 + $0x338] sm:$0xff]
    %v189 = vld [vmem:[#allocation5 + $0x340] sm:$0xff]
    %v190 = vld [vmem:[#allocation5 + $0x348] sm:$0xff]
    %v191 = vld [vmem:[#allocation5 + $0x350] sm:$0xff]
    %v192 = vld [vmem:[#allocation5 + $0x358] sm:$0xff]
    %v193 = vld [vmem:[#allocation5 + $0x360] sm:$0xff]
    %v194 = vld [vmem:[#allocation5 + $0x368] sm:$0xff]
    %v195 = vld [vmem:[#allocation5 + $0x370] sm:$0xff]
    %v196 = vld [vmem:[#allocation5 + $0x378] sm:$0xff]
    %v197 = vld [vmem:[#allocation5 + $0x380] sm:$0xff]
    %v198 = vld [vmem:[#allocation5 + $0x388] sm:$0xff]
    %v199 = vld [vmem:[#allocation5 + $0x390] sm:$0xff]
    %v200 = vld [vmem:[#allocation5 + $0x398] sm:$0xff]
    %v201 = vld [vmem:[#allocation5 + $0x3a0] sm:$0xff]
    %v202 = vld [vmem:[#allocation5 + $0x3a8] sm:$0xff]
    %v203 = vld [vmem:[#allocation5 + $0x3b0] sm:$0xff]
    %v204 = vld [vmem:[#allocation5 + $0x3b8] sm:$0xff]
    %v205 = vld [vmem:[#allocation5 + $0x3c0] sm:$0xff]
    %v206 = vld [vmem:[#allocation5 + $0x3c8] sm:$0xff]
    %v207 = vld [vmem:[#allocation5 + $0x3d0] sm:$0xff]
    %v208 = vld [vmem:[#allocation5 + $0x3d8] sm:$0xff]
    %v209 = vld [vmem:[#allocation5 + $0x3e0] sm:$0xff]
    %v210 = vld [vmem:[#allocation5 + $0x3e8] sm:$0xff]
    %v211 = vld [vmem:[#allocation5 + $0x3f0] sm:$0xff]
    %v212 = vld [vmem:[#allocation5 + $0x3f8] sm:$0xff]
    %v213 = vld [vmem:[#allocation5 + $0x400] sm:$0xff]
    %v214 = vld [vmem:[#allocation5 + $0x408] sm:$0xff]
    %v215 = vld [vmem:[#allocation5 + $0x410] sm:$0xff]
    %v216 = vld [vmem:[#allocation5 + $0x418] sm:$0xff]
    %v217 = vld [vmem:[#allocation5 + $0x420] sm:$0xff]
    %v218 = vld [vmem:[#allocation5 + $0x428] sm:$0xff]
    %v219 = vld [vmem:[#allocation5 + $0x430] sm:$0xff]
    %v220 = vld [vmem:[#allocation5 + $0x438] sm:$0xff]
    %v221 = vld [vmem:[#allocation5 + $0x440] sm:$0xff]
    %v222 = vld [vmem:[#allocation5 + $0x448] sm:$0xff]
    %v223 = vld [vmem:[#allocation5 + $0x450] sm:$0xff]
    %v224 = vld [vmem:[#allocation5 + $0x458] sm:$0xff]
    %v225 = vld [vmem:[#allocation5 + $0x460] sm:$0xff]
    %v226 = vld [vmem:[#allocation5 + $0x468] sm:$0xff]
    %v227 = vld [vmem:[#allocation5 + $0x470] sm:$0xff]
    %v228 = vld [vmem:[#allocation5 + $0x478] sm:$0xff]
    %v229 = vld [vmem:[#allocation5 + $0x480] sm:$0xff]
    %v230 = vld [vmem:[#allocation5 + $0x488] sm:$0xff]
    %v231 = vld [vmem:[#allocation5 + $0x490] sm:$0xff]
    %v232 = vld [vmem:[#allocation5 + $0x498] sm:$0xff]
    %v233 = vld [vmem:[#allocation5 + $0x4a0] sm:$0xff]
    %v234 = vld [vmem:[#allocation5 + $0x4a8] sm:$0xff]
    %v235 = vld [vmem:[#allocation5 + $0x4b0] sm:$0xff]
    %v236 = vld [vmem:[#allocation5 + $0x4b8] sm:$0xff]
    %v237 = vld [vmem:[#allocation5 + $0x4c0] sm:$0xff]
    %v238 = vld [vmem:[#allocation5 + $0x4c8] sm:$0xff]
    %v239 = vld [vmem:[#allocation5 + $0x4d0] sm:$0xff]
    %v240 = vld [vmem:[#allocation5 + $0x4d8] sm:$0xff]
    %v241 = vld [vmem:[#allocation5 + $0x4e0] sm:$0xff]
    %v242 = vld [vmem:[#allocation5 + $0x4e8] sm:$0xff]
    %v243 = vld [vmem:[#allocation5 + $0x4f0] sm:$0xff]
    %v244 = vld [vmem:[#allocation5 + $0x4f8] sm:$0xff]
    %v245 = vld [vmem:[#allocation5 + $0x500] sm:$0xff]
    %v246 = vld [vmem:[#allocation5 + $0x508] sm:$0xff]
    %v247 = vld [vmem:[#allocation5 + $0x510] sm:$0xff]
    %v248 = vld [vmem:[#allocation5 + $0x518] sm:$0xff]
    %v249 = vld [vmem:[#allocation5 + $0x520] sm:$0xff]
    %v250 = vld [vmem:[#allocation5 + $0x528] sm:$0xff]
    %v251 = vld [vmem:[#allocation5 + $0x530] sm:$0xff]
    %v252 = vld [vmem:[#allocation5 + $0x538] sm:$0xff]
    %v253 = vld [vmem:[#allocation5 + $0x540] sm:$0xff]
    %v254 = vld [vmem:[#allocation5 + $0x548] sm:$0xff]
    %v255 = vld [vmem:[#allocation5 + $0x550] sm:$0xff]
    %v256 = vld [vmem:[#allocation5 + $0x558] sm:$0xff]
    %v257 = vld [vmem:[#allocation5 + $0x560] sm:$0xff]
    %v258 = vld [vmem:[#allocation5 + $0x568] sm:$0xff]
    %v259 = vld [vmem:[#allocation5 + $0x570] sm:$0xff]
    %v260 = vld [vmem:[#allocation5 + $0x578] sm:$0xff]
    %v261 = vld [vmem:[#allocation5 + $0x580] sm:$0xff]
    %v262 = vld [vmem:[#allocation5 + $0x588] sm:$0xff]
    %v263 = vld [vmem:[#allocation5 + $0x590] sm:$0xff]
    %v264 = vld [vmem:[#allocation5 + $0x598] sm:$0xff]
    %v265 = vld [vmem:[#allocation5 + $0x5a0] sm:$0xff]
    %v266 = vld [vmem:[#allocation5 + $0x5a8] sm:$0xff]
    %v267 = vld [vmem:[#allocation5 + $0x5b0] sm:$0xff]
    %v268 = vld [vmem:[#allocation5 + $0x5b8] sm:$0xff]
    %v269 = vld [vmem:[#allocation5 + $0x5c0] sm:$0xff]
    %v270 = vld [vmem:[#allocation5 + $0x5c8] sm:$0xff]
    %v271 = vld [vmem:[#allocation5 + $0x5d0] sm:$0xff]
    %v272 = vld [vmem:[#allocation5 + $0x5d8] sm:$0xff]
    %v273 = vld [vmem:[#allocation5 + $0x5e0] sm:$0xff]
    %v274 = vld [vmem:[#allocation5 + $0x5e8] sm:$0xff]
    %v275 = vld [vmem:[#allocation5 + $0x5f0] sm:$0xff]
    %v276 = vld [vmem:[#allocation5 + $0x5f8] sm:$0xff]
    %v277 = vld [vmem:[#allocation5 + $0x600] sm:$0xff]
    %v278 = vld [vmem:[#allocation5 + $0x608] sm:$0xff]
    %v279 = vld [vmem:[#allocation5 + $0x610] sm:$0xff]
    %v280 = vld [vmem:[#allocation5 + $0x618] sm:$0xff]
    %v281 = vld [vmem:[%s2] sm:$0xf]
    %v283 = vlaneseq
    %v284 = vshrl.u32 %v283, 7
    %v285 = vsub.s32 0, %v284
    %v286 = vrot.slane %v281, %v285
    %v287 = vlaneseq
    %v288 = vshrl.u32 %v287, 7
    %v289 = vsub.s32 1, %v288
    %v290 = vrot.slane %v281, %v289
    %v291 = vlaneseq
    %v292 = vshrl.u32 %v291, 7
    %v293 = vsub.s32 2, %v292
    %v294 = vrot.slane %v281, %v293
    %v295 = vlaneseq
    %v296 = vshrl.u32 %v295, 7
    %v297 = vsub.s32 3, %v296
    %v298 = vrot.slane %v281, %v297
    %v307 = vunpack.c.l.b16 %v81
    %v308 = vunpack.c.h.b16 %v81
    %v309 = vunpack.c.l.b16 %v82
    %v310 = vunpack.c.h.b16 %v82
    %v311 = vunpack.c.l.b16 %v83
    %v312 = vunpack.c.h.b16 %v83
    %v313 = vunpack.c.l.b16 %v84
    %v314 = vpack.c.b16 %v307, %v307
    %v315 = vpack.c.b16 %v308, %v308
    %v316 = vpack.c.b16 %v309, %v309
    %v317 = vpack.c.b16 %v310, %v310
    %v318 = vpack.c.b16 %v311, %v311
    %v319 = vpack.c.b16 %v312, %v312
    %v320 = vpack.c.b16 %v313, %v313
    %v523 = vunpack.c.l.b16 %v85
    %v524 = vunpack.c.h.b16 %v85
    %v525 = vunpack.c.l.b16 %v86
    %v526 = vunpack.c.h.b16 %v86
    %v527 = vunpack.c.l.b16 %v87
    %v528 = vunpack.c.h.b16 %v87
    %v529 = vunpack.c.l.b16 %v88
    %v530 = vunpack.c.h.b16 %v88
    %v531 = vunpack.c.l.b16 %v89
    %v532 = vunpack.c.h.b16 %v89
    %v533 = vunpack.c.l.b16 %v90
    %v534 = vunpack.c.h.b16 %v90
    %v535 = vunpack.c.l.b16 %v91
    %v536 = vunpack.c.h.b16 %v91
    %v537 = vunpack.c.l.b16 %v92
    %v538 = vunpack.c.h.b16 %v92
    %v539 = vunpack.c.l.b16 %v93
    %v540 = vunpack.c.h.b16 %v93
    %v541 = vunpack.c.l.b16 %v94
    %v542 = vunpack.c.h.b16 %v94
    %v543 = vunpack.c.l.b16 %v95
    %v544 = vunpack.c.h.b16 %v95
    %v545 = vunpack.c.l.b16 %v96
    %v546 = vunpack.c.h.b16 %v96
    %v547 = vunpack.c.l.b16 %v97
    %v548 = vunpack.c.h.b16 %v97
    %v549 = vunpack.c.l.b16 %v98
    %v550 = vunpack.c.h.b16 %v98
    %v551 = vunpack.c.l.b16 %v99
    %v552 = vunpack.c.h.b16 %v99
    %v553 = vunpack.c.l.b16 %v100
    %v554 = vunpack.c.h.b16 %v100
    %v555 = vunpack.c.l.b16 %v101
    %v556 = vunpack.c.h.b16 %v101
    %v557 = vunpack.c.l.b16 %v102
    %v558 = vunpack.c.h.b16 %v102
    %v559 = vunpack.c.l.b16 %v103
    %v560 = vunpack.c.h.b16 %v103
    %v561 = vunpack.c.l.b16 %v104
    %v562 = vunpack.c.h.b16 %v104
    %v563 = vunpack.c.l.b16 %v105
    %v564 = vunpack.c.h.b16 %v105
    %v565 = vunpack.c.l.b16 %v106
    %v566 = vunpack.c.h.b16 %v106
    %v567 = vunpack.c.l.b16 %v107
    %v568 = vunpack.c.h.b16 %v107
    %v569 = vunpack.c.l.b16 %v108
    %v570 = vunpack.c.h.b16 %v108
    %v571 = vunpack.c.l.b16 %v109
    %v572 = vunpack.c.h.b16 %v109
    %v573 = vunpack.c.l.b16 %v110
    %v574 = vunpack.c.h.b16 %v110
    %v575 = vunpack.c.l.b16 %v111
    %v576 = vunpack.c.h.b16 %v111
    %v577 = vunpack.c.l.b16 %v112
    %v578 = vunpack.c.h.b16 %v112
    %v579 = vunpack.c.l.b16 %v113
    %v580 = vunpack.c.h.b16 %v113
    %v581 = vunpack.c.l.b16 %v114
    %v582 = vunpack.c.h.b16 %v114
    %v583 = vunpack.c.l.b16 %v115
    %v584 = vunpack.c.h.b16 %v115
    %v585 = vunpack.c.l.b16 %v116
    %v586 = vunpack.c.h.b16 %v116
    %v587 = vunpack.c.l.b16 %v117
    %v588 = vunpack.c.h.b16 %v117
    %v589 = vunpack.c.l.b16 %v118
    %v590 = vunpack.c.h.b16 %v118
    %v591 = vunpack.c.l.b16 %v119
    %v592 = vunpack.c.h.b16 %v119
    %v593 = vunpack.c.l.b16 %v120
    %v594 = vunpack.c.h.b16 %v120
    %v595 = vunpack.c.l.b16 %v121
    %v596 = vunpack.c.h.b16 %v121
    %v597 = vunpack.c.l.b16 %v122
    %v598 = vunpack.c.h.b16 %v122
    %v599 = vunpack.c.l.b16 %v123
    %v600 = vunpack.c.h.b16 %v123
    %v601 = vunpack.c.l.b16 %v124
    %v602 = vunpack.c.h.b16 %v124
    %v603 = vunpack.c.l.b16 %v125
    %v604 = vunpack.c.h.b16 %v125
    %v605 = vunpack.c.l.b16 %v126
    %v606 = vunpack.c.h.b16 %v126
    %v607 = vunpack.c.l.b16 %v127
    %v608 = vunpack.c.h.b16 %v127
    %v609 = vunpack.c.l.b16 %v128
    %v610 = vunpack.c.h.b16 %v128
    %v611 = vunpack.c.l.b16 %v129
    %v612 = vunpack.c.h.b16 %v129
    %v613 = vunpack.c.l.b16 %v130
    %v614 = vunpack.c.h.b16 %v130
    %v615 = vunpack.c.l.b16 %v131
    %v616 = vunpack.c.h.b16 %v131
    %v617 = vunpack.c.l.b16 %v132
    %v618 = vunpack.c.h.b16 %v132
    %v619 = vunpack.c.l.b16 %v133
    %v620 = vunpack.c.h.b16 %v133
    %v621 = vunpack.c.l.b16 %v134
    %v622 = vunpack.c.h.b16 %v134
    %v623 = vunpack.c.l.b16 %v135
    %v624 = vunpack.c.h.b16 %v135
    %v625 = vunpack.c.l.b16 %v136
    %v626 = vunpack.c.h.b16 %v136
    %v627 = vunpack.c.l.b16 %v137
    %v628 = vunpack.c.h.b16 %v137
    %v629 = vunpack.c.l.b16 %v138
    %v630 = vunpack.c.h.b16 %v138
    %v631 = vunpack.c.l.b16 %v139
    %v632 = vunpack.c.h.b16 %v139
    %v633 = vunpack.c.l.b16 %v140
    %v634 = vunpack.c.h.b16 %v140
    %v635 = vunpack.c.l.b16 %v141
    %v636 = vunpack.c.h.b16 %v141
    %v637 = vunpack.c.l.b16 %v142
    %v638 = vunpack.c.h.b16 %v142
    %v639 = vunpack.c.l.b16 %v143
    %v640 = vunpack.c.h.b16 %v143
    %v641 = vunpack.c.l.b16 %v144
    %v642 = vunpack.c.h.b16 %v144
    %v643 = vunpack.c.l.b16 %v145
    %v644 = vunpack.c.h.b16 %v145
    %v645 = vunpack.c.l.b16 %v146
    %v646 = vunpack.c.h.b16 %v146
    %v647 = vunpack.c.l.b16 %v147
    %v648 = vunpack.c.h.b16 %v147
    %v649 = vunpack.c.l.b16 %v148
    %v650 = vunpack.c.h.b16 %v148
    %v651 = vunpack.c.l.b16 %v149
    %v652 = vunpack.c.h.b16 %v149
    %v653 = vunpack.c.l.b16 %v150
    %v654 = vunpack.c.h.b16 %v150
    %v655 = vunpack.c.l.b16 %v151
    %v656 = vunpack.c.h.b16 %v151
    %v657 = vunpack.c.l.b16 %v152
    %v658 = vunpack.c.h.b16 %v152
    %v659 = vunpack.c.l.b16 %v153
    %v660 = vunpack.c.h.b16 %v153
    %v661 = vunpack.c.l.b16 %v154
    %v662 = vunpack.c.h.b16 %v154
    %v663 = vunpack.c.l.b16 %v155
    %v664 = vunpack.c.h.b16 %v155
    %v665 = vunpack.c.l.b16 %v156
    %v666 = vunpack.c.h.b16 %v156
    %v667 = vunpack.c.l.b16 %v157
    %v668 = vunpack.c.h.b16 %v157
    %v669 = vunpack.c.l.b16 %v158
    %v670 = vunpack.c.h.b16 %v158
    %v671 = vunpack.c.l.b16 %v159
    %v672 = vunpack.c.h.b16 %v159
    %v673 = vunpack.c.l.b16 %v160
    %v674 = vunpack.c.h.b16 %v160
    %v675 = vunpack.c.l.b16 %v161
    %v676 = vunpack.c.h.b16 %v161
    %v677 = vunpack.c.l.b16 %v162
    %v678 = vunpack.c.h.b16 %v162
    %v679 = vunpack.c.l.b16 %v163
    %v680 = vunpack.c.h.b16 %v163
    %v681 = vunpack.c.l.b16 %v164
    %v682 = vunpack.c.h.b16 %v164
    %v683 = vunpack.c.l.b16 %v165
    %v684 = vunpack.c.h.b16 %v165
    %v685 = vunpack.c.l.b16 %v166
    %v686 = vunpack.c.h.b16 %v166
    %v687 = vunpack.c.l.b16 %v167
    %v688 = vunpack.c.h.b16 %v167
    %v689 = vunpack.c.l.b16 %v168
    %v690 = vunpack.c.h.b16 %v168
    %v691 = vunpack.c.l.b16 %v169
    %v692 = vunpack.c.h.b16 %v169
    %v693 = vunpack.c.l.b16 %v170
    %v694 = vunpack.c.h.b16 %v170
    %v695 = vunpack.c.l.b16 %v171
    %v696 = vunpack.c.h.b16 %v171
    %v697 = vunpack.c.l.b16 %v172
    %v698 = vunpack.c.h.b16 %v172
    %v699 = vunpack.c.l.b16 %v173
    %v700 = vunpack.c.h.b16 %v173
    %v701 = vunpack.c.l.b16 %v174
    %v702 = vunpack.c.h.b16 %v174
    %v703 = vunpack.c.l.b16 %v175
    %v704 = vunpack.c.h.b16 %v175
    %v705 = vunpack.c.l.b16 %v176
    %v706 = vunpack.c.h.b16 %v176
    %v707 = vunpack.c.l.b16 %v177
    %v708 = vunpack.c.h.b16 %v177
    %v709 = vunpack.c.l.b16 %v178
    %v710 = vunpack.c.h.b16 %v178
    %v711 = vunpack.c.l.b16 %v179
    %v712 = vunpack.c.h.b16 %v179
    %v713 = vunpack.c.l.b16 %v180
    %v714 = vunpack.c.h.b16 %v180
    %v715 = vunpack.c.l.b16 %v181
    %v716 = vunpack.c.h.b16 %v181
    %v717 = vunpack.c.l.b16 %v182
    %v718 = vunpack.c.h.b16 %v182
    %v719 = vunpack.c.l.b16 %v183
    %v720 = vunpack.c.h.b16 %v183
    %v721 = vunpack.c.l.b16 %v184
    %v722 = vunpack.c.h.b16 %v184
    %v723 = vunpack.c.l.b16 %v185
    %v724 = vunpack.c.h.b16 %v185
    %v725 = vunpack.c.l.b16 %v186
    %v726 = vunpack.c.h.b16 %v186
    %v727 = vunpack.c.l.b16 %v187
    %v728 = vunpack.c.h.b16 %v187
    %v729 = vunpack.c.l.b16 %v188
    %v730 = vunpack.c.h.b16 %v188
    %v731 = vunpack.c.l.b16 %v189
    %v732 = vunpack.c.h.b16 %v189
    %v733 = vunpack.c.l.b16 %v190
    %v734 = vunpack.c.h.b16 %v190
    %v735 = vunpack.c.l.b16 %v191
    %v736 = vunpack.c.h.b16 %v191
    %v737 = vunpack.c.l.b16 %v192
    %v738 = vunpack.c.h.b16 %v192
    %v739 = vunpack.c.l.b16 %v193
    %v740 = vunpack.c.h.b16 %v193
    %v741 = vunpack.c.l.b16 %v194
    %v742 = vunpack.c.h.b16 %v194
    %v743 = vunpack.c.l.b16 %v195
    %v744 = vunpack.c.h.b16 %v195
    %v745 = vunpack.c.l.b16 %v196
    %v746 = vunpack.c.h.b16 %v196
    %v747 = vunpack.c.l.b16 %v197
    %v748 = vunpack.c.h.b16 %v197
    %v749 = vunpack.c.l.b16 %v198
    %v750 = vunpack.c.h.b16 %v198
    %v751 = vunpack.c.l.b16 %v199
    %v752 = vunpack.c.h.b16 %v199
    %v753 = vunpack.c.l.b16 %v200
    %v754 = vunpack.c.h.b16 %v200
    %v755 = vunpack.c.l.b16 %v201
    %v756 = vunpack.c.h.b16 %v201
    %v757 = vunpack.c.l.b16 %v202
    %v758 = vunpack.c.h.b16 %v202
    %v759 = vunpack.c.l.b16 %v203
    %v760 = vunpack.c.h.b16 %v203
    %v761 = vunpack.c.l.b16 %v204
    %v762 = vunpack.c.h.b16 %v204
    %v763 = vunpack.c.l.b16 %v205
    %v764 = vunpack.c.h.b16 %v205
    %v765 = vunpack.c.l.b16 %v206
    %v766 = vunpack.c.h.b16 %v206
    %v767 = vunpack.c.l.b16 %v207
    %v768 = vunpack.c.h.b16 %v207
    %v769 = vunpack.c.l.b16 %v208
    %v770 = vunpack.c.h.b16 %v208
    %v771 = vunpack.c.l.b16 %v209
    %v772 = vunpack.c.h.b16 %v209
    %v773 = vunpack.c.l.b16 %v210
    %v774 = vunpack.c.h.b16 %v210
    %v775 = vunpack.c.l.b16 %v211
    %v776 = vunpack.c.h.b16 %v211
    %v777 = vunpack.c.l.b16 %v212
    %v778 = vunpack.c.h.b16 %v212
    %v779 = vunpack.c.l.b16 %v213
    %v780 = vunpack.c.h.b16 %v213
    %v781 = vunpack.c.l.b16 %v214
    %v782 = vunpack.c.h.b16 %v214
    %v783 = vunpack.c.l.b16 %v215
    %v784 = vunpack.c.h.b16 %v215
    %v785 = vunpack.c.l.b16 %v216
    %v786 = vunpack.c.h.b16 %v216
    %v787 = vunpack.c.l.b16 %v217
    %v788 = vunpack.c.h.b16 %v217
    %v789 = vunpack.c.l.b16 %v218
    %v790 = vunpack.c.h.b16 %v218
    %v791 = vunpack.c.l.b16 %v219
    %v792 = vunpack.c.h.b16 %v219
    %v793 = vunpack.c.l.b16 %v220
    %v794 = vunpack.c.h.b16 %v220
    %v795 = vunpack.c.l.b16 %v221
    %v796 = vunpack.c.h.b16 %v221
    %v797 = vunpack.c.l.b16 %v222
    %v798 = vunpack.c.h.b16 %v222
    %v799 = vunpack.c.l.b16 %v223
    %v800 = vunpack.c.h.b16 %v223
    %v801 = vunpack.c.l.b16 %v224
    %v802 = vunpack.c.h.b16 %v224
    %v803 = vunpack.c.l.b16 %v225
    %v804 = vunpack.c.h.b16 %v225
    %v805 = vunpack.c.l.b16 %v226
    %v806 = vunpack.c.h.b16 %v226
    %v807 = vunpack.c.l.b16 %v227
    %v808 = vunpack.c.h.b16 %v227
    %v809 = vunpack.c.l.b16 %v228
    %v810 = vunpack.c.h.b16 %v228
    %v811 = vunpack.c.l.b16 %v229
    %v812 = vunpack.c.h.b16 %v229
    %v813 = vunpack.c.l.b16 %v230
    %v814 = vunpack.c.h.b16 %v230
    %v815 = vunpack.c.l.b16 %v231
    %v816 = vunpack.c.h.b16 %v231
    %v817 = vunpack.c.l.b16 %v232
    %v818 = vunpack.c.h.b16 %v232
    %v819 = vunpack.c.l.b16 %v233
    %v820 = vunpack.c.h.b16 %v233
    %v821 = vunpack.c.l.b16 %v234
    %v822 = vunpack.c.h.b16 %v234
    %v823 = vunpack.c.l.b16 %v235
    %v824 = vunpack.c.h.b16 %v235
    %v825 = vunpack.c.l.b16 %v236
    %v826 = vunpack.c.h.b16 %v236
    %v827 = vunpack.c.l.b16 %v237
    %v828 = vunpack.c.h.b16 %v237
    %v829 = vunpack.c.l.b16 %v238
    %v830 = vunpack.c.h.b16 %v238
    %v831 = vunpack.c.l.b16 %v239
    %v832 = vunpack.c.h.b16 %v239
    %v833 = vunpack.c.l.b16 %v240
    %v834 = vunpack.c.h.b16 %v240
    %v835 = vunpack.c.l.b16 %v241
    %v836 = vunpack.c.h.b16 %v241
    %v837 = vunpack.c.l.b16 %v242
    %v838 = vunpack.c.h.b16 %v242
    %v839 = vunpack.c.l.b16 %v243
    %v840 = vunpack.c.h.b16 %v243
    %v841 = vunpack.c.l.b16 %v244
    %v842 = vunpack.c.h.b16 %v244
    %v843 = vunpack.c.l.b16 %v245
    %v844 = vunpack.c.h.b16 %v245
    %v845 = vunpack.c.l.b16 %v246
    %v846 = vunpack.c.h.b16 %v246
    %v847 = vunpack.c.l.b16 %v247
    %v848 = vunpack.c.h.b16 %v247
    %v849 = vunpack.c.l.b16 %v248
    %v850 = vunpack.c.h.b16 %v248
    %v851 = vunpack.c.l.b16 %v249
    %v852 = vunpack.c.h.b16 %v249
    %v853 = vunpack.c.l.b16 %v250
    %v854 = vunpack.c.h.b16 %v250
    %v855 = vunpack.c.l.b16 %v251
    %v856 = vunpack.c.h.b16 %v251
    %v857 = vunpack.c.l.b16 %v252
    %v858 = vunpack.c.h.b16 %v252
    %v859 = vunpack.c.l.b16 %v253
    %v860 = vunpack.c.h.b16 %v253
    %v861 = vunpack.c.l.b16 %v254
    %v862 = vunpack.c.h.b16 %v254
    %v863 = vunpack.c.l.b16 %v255
    %v864 = vunpack.c.h.b16 %v255
    %v865 = vunpack.c.l.b16 %v256
    %v866 = vunpack.c.h.b16 %v256
    %v867 = vunpack.c.l.b16 %v257
    %v868 = vunpack.c.h.b16 %v257
    %v869 = vunpack.c.l.b16 %v258
    %v870 = vunpack.c.h.b16 %v258
    %v871 = vunpack.c.l.b16 %v259
    %v872 = vunpack.c.h.b16 %v259
    %v873 = vunpack.c.l.b16 %v260
    %v874 = vunpack.c.h.b16 %v260
    %v875 = vunpack.c.l.b16 %v261
    %v876 = vunpack.c.h.b16 %v261
    %v877 = vunpack.c.l.b16 %v262
    %v878 = vunpack.c.h.b16 %v262
    %v879 = vunpack.c.l.b16 %v263
    %v880 = vunpack.c.h.b16 %v263
    %v881 = vunpack.c.l.b16 %v264
    %v882 = vunpack.c.h.b16 %v264
    %v883 = vunpack.c.l.b16 %v265
    %v884 = vunpack.c.h.b16 %v265
    %v885 = vunpack.c.l.b16 %v266
    %v886 = vunpack.c.h.b16 %v266
    %v887 = vunpack.c.l.b16 %v267
    %v888 = vunpack.c.h.b16 %v267
    %v889 = vunpack.c.l.b16 %v268
    %v890 = vunpack.c.h.b16 %v268
    %v891 = vunpack.c.l.b16 %v269
    %v892 = vunpack.c.h.b16 %v269
    %v893 = vunpack.c.l.b16 %v270
    %v894 = vunpack.c.h.b16 %v270
    %v895 = vunpack.c.l.b16 %v271
    %v896 = vunpack.c.h.b16 %v271
    %v897 = vunpack.c.l.b16 %v272
    %v898 = vunpack.c.h.b16 %v272
    %v899 = vunpack.c.l.b16 %v273
    %v900 = vunpack.c.h.b16 %v273
    %v901 = vunpack.c.l.b16 %v274
    %v902 = vunpack.c.h.b16 %v274
    %v903 = vunpack.c.l.b16 %v275
    %v904 = vunpack.c.h.b16 %v275
    %v905 = vunpack.c.l.b16 %v276
    %v906 = vunpack.c.h.b16 %v276
    %v907 = vunpack.c.l.b16 %v277
    %v908 = vunpack.c.h.b16 %v277
    %v909 = vunpack.c.l.b16 %v278
    %v910 = vunpack.c.h.b16 %v278
    %v911 = vunpack.c.l.b16 %v279
    %v912 = vunpack.c.h.b16 %v279
    %v913 = vunpack.c.l.b16 %v280
    %v914 = vunpack.c.h.b16 %v280
    %v915 = vpack.c.b16 %v527, %v523
    %v916 = vpack.c.b16 %v528, %v524
    %v917 = vpack.c.b16 %v529, %v525
    %v918 = vpack.c.b16 %v530, %v526
    %v919 = vpack.c.b16 %v535, %v531
    %v920 = vpack.c.b16 %v536, %v532
    %v921 = vpack.c.b16 %v537, %v533
    %v922 = vpack.c.b16 %v538, %v534
    %v923 = vpack.c.b16 %v543, %v539
    %v924 = vpack.c.b16 %v544, %v540
    %v925 = vpack.c.b16 %v545, %v541
    %v926 = vpack.c.b16 %v546, %v542
    %v927 = vpack.c.b16 %v551, %v547
    %v928 = vpack.c.b16 %v552, %v548
    %v929 = vpack.c.b16 %v553, %v549
    %v930 = vpack.c.b16 %v554, %v550
    %v931 = vpack.c.b16 %v559, %v555
    %v932 = vpack.c.b16 %v560, %v556
    %v933 = vpack.c.b16 %v561, %v557
    %v934 = vpack.c.b16 %v562, %v558
    %v935 = vpack.c.b16 %v567, %v563
    %v936 = vpack.c.b16 %v568, %v564
    %v937 = vpack.c.b16 %v569, %v565
    %v938 = vpack.c.b16 %v570, %v566
    %v939 = vpack.c.b16 %v575, %v571
    %v940 = vpack.c.b16 %v576, %v572
    %v941 = vpack.c.b16 %v577, %v573
    %v942 = vpack.c.b16 %v578, %v574
    %v943 = vpack.c.b16 %v583, %v579
    %v944 = vpack.c.b16 %v584, %v580
    %v945 = vpack.c.b16 %v585, %v581
    %v946 = vpack.c.b16 %v586, %v582
    %v947 = vpack.c.b16 %v591, %v587
    %v948 = vpack.c.b16 %v592, %v588
    %v949 = vpack.c.b16 %v593, %v589
    %v950 = vpack.c.b16 %v594, %v590
    %v951 = vpack.c.b16 %v599, %v595
    %v952 = vpack.c.b16 %v600, %v596
    %v953 = vpack.c.b16 %v601, %v597
    %v954 = vpack.c.b16 %v602, %v598
    %v955 = vpack.c.b16 %v607, %v603
    %v956 = vpack.c.b16 %v608, %v604
    %v957 = vpack.c.b16 %v609, %v605
    %v958 = vpack.c.b16 %v610, %v606
    %v959 = vpack.c.b16 %v615, %v611
    %v960 = vpack.c.b16 %v616, %v612
    %v961 = vpack.c.b16 %v617, %v613
    %v962 = vpack.c.b16 %v618, %v614
    %v963 = vpack.c.b16 %v623, %v619
    %v964 = vpack.c.b16 %v624, %v620
    %v965 = vpack.c.b16 %v625, %v621
    %v966 = vpack.c.b16 %v626, %v622
    %v967 = vpack.c.b16 %v631, %v627
    %v968 = vpack.c.b16 %v632, %v628
    %v969 = vpack.c.b16 %v633, %v629
    %v970 = vpack.c.b16 %v634, %v630
    %v971 = vpack.c.b16 %v639, %v635
    %v972 = vpack.c.b16 %v640, %v636
    %v973 = vpack.c.b16 %v641, %v637
    %v974 = vpack.c.b16 %v642, %v638
    %v975 = vpack.c.b16 %v647, %v643
    %v976 = vpack.c.b16 %v648, %v644
    %v977 = vpack.c.b16 %v649, %v645
    %v978 = vpack.c.b16 %v650, %v646
    %v979 = vpack.c.b16 %v655, %v651
    %v980 = vpack.c.b16 %v656, %v652
    %v981 = vpack.c.b16 %v657, %v653
    %v982 = vpack.c.b16 %v658, %v654
    %v983 = vpack.c.b16 %v663, %v659
    %v984 = vpack.c.b16 %v664, %v660
    %v985 = vpack.c.b16 %v665, %v661
    %v986 = vpack.c.b16 %v666, %v662
    %v987 = vpack.c.b16 %v671, %v667
    %v988 = vpack.c.b16 %v672, %v668
    %v989 = vpack.c.b16 %v673, %v669
    %v990 = vpack.c.b16 %v674, %v670
    %v991 = vpack.c.b16 %v679, %v675
    %v992 = vpack.c.b16 %v680, %v676
    %v993 = vpack.c.b16 %v681, %v677
    %v994 = vpack.c.b16 %v682, %v678
    %v995 = vpack.c.b16 %v687, %v683
    %v996 = vpack.c.b16 %v688, %v684
    %v997 = vpack.c.b16 %v689, %v685
    %v998 = vpack.c.b16 %v690, %v686
    %v999 = vpack.c.b16 %v695, %v691
    %v1000 = vpack.c.b16 %v696, %v692
    %v1001 = vpack.c.b16 %v697, %v693
    %v1002 = vpack.c.b16 %v698, %v694
    %v1003 = vpack.c.b16 %v703, %v699
    %v1004 = vpack.c.b16 %v704, %v700
    %v1005 = vpack.c.b16 %v705, %v701
    %v1006 = vpack.c.b16 %v706, %v702
    %v1007 = vpack.c.b16 %v711, %v707
    %v1008 = vpack.c.b16 %v712, %v708
    %v1009 = vpack.c.b16 %v713, %v709
    %v1010 = vpack.c.b16 %v714, %v710
    %v1011 = vpack.c.b16 %v719, %v715
    %v1012 = vpack.c.b16 %v720, %v716
    %v1013 = vpack.c.b16 %v721, %v717
    %v1014 = vpack.c.b16 %v722, %v718
    %v1015 = vpack.c.b16 %v727, %v723
    %v1016 = vpack.c.b16 %v728, %v724
    %v1017 = vpack.c.b16 %v729, %v725
    %v1018 = vpack.c.b16 %v730, %v726
    %v1019 = vpack.c.b16 %v735, %v731
    %v1020 = vpack.c.b16 %v736, %v732
    %v1021 = vpack.c.b16 %v737, %v733
    %v1022 = vpack.c.b16 %v738, %v734
    %v1023 = vpack.c.b16 %v743, %v739
    %v1024 = vpack.c.b16 %v744, %v740
    %v1025 = vpack.c.b16 %v745, %v741
    %v1026 = vpack.c.b16 %v746, %v742
    %v1027 = vpack.c.b16 %v751, %v747
    %v1028 = vpack.c.b16 %v752, %v748
    %v1029 = vpack.c.b16 %v753, %v749
    %v1030 = vpack.c.b16 %v754, %v750
    %v1031 = vpack.c.b16 %v759, %v755
    %v1032 = vpack.c.b16 %v760, %v756
    %v1033 = vpack.c.b16 %v761, %v757
    %v1034 = vpack.c.b16 %v762, %v758
    %v1035 = vpack.c.b16 %v767, %v763
    %v1036 = vpack.c.b16 %v768, %v764
    %v1037 = vpack.c.b16 %v769, %v765
    %v1038 = vpack.c.b16 %v770, %v766
    %v1039 = vpack.c.b16 %v775, %v771
    %v1040 = vpack.c.b16 %v776, %v772
    %v1041 = vpack.c.b16 %v777, %v773
    %v1042 = vpack.c.b16 %v778, %v774
    %v1043 = vpack.c.b16 %v783, %v779
    %v1044 = vpack.c.b16 %v784, %v780
    %v1045 = vpack.c.b16 %v785, %v781
    %v1046 = vpack.c.b16 %v786, %v782
    %v1047 = vpack.c.b16 %v791, %v787
    %v1048 = vpack.c.b16 %v792, %v788
    %v1049 = vpack.c.b16 %v793, %v789
    %v1050 = vpack.c.b16 %v794, %v790
    %v1051 = vpack.c.b16 %v799, %v795
    %v1052 = vpack.c.b16 %v800, %v796
    %v1053 = vpack.c.b16 %v801, %v797
    %v1054 = vpack.c.b16 %v802, %v798
    %v1055 = vpack.c.b16 %v807, %v803
    %v1056 = vpack.c.b16 %v808, %v804
    %v1057 = vpack.c.b16 %v809, %v805
    %v1058 = vpack.c.b16 %v810, %v806
    %v1059 = vpack.c.b16 %v815, %v811
    %v1060 = vpack.c.b16 %v816, %v812
    %v1061 = vpack.c.b16 %v817, %v813
    %v1062 = vpack.c.b16 %v818, %v814
    %v1063 = vpack.c.b16 %v823, %v819
    %v1064 = vpack.c.b16 %v824, %v820
    %v1065 = vpack.c.b16 %v825, %v821
    %v1066 = vpack.c.b16 %v826, %v822
    %v1067 = vpack.c.b16 %v831, %v827
    %v1068 = vpack.c.b16 %v832, %v828
    %v1069 = vpack.c.b16 %v833, %v829
    %v1070 = vpack.c.b16 %v834, %v830
    %v1071 = vpack.c.b16 %v839, %v835
    %v1072 = vpack.c.b16 %v840, %v836
    %v1073 = vpack.c.b16 %v841, %v837
    %v1074 = vpack.c.b16 %v842, %v838
    %v1075 = vpack.c.b16 %v847, %v843
    %v1076 = vpack.c.b16 %v848, %v844
    %v1077 = vpack.c.b16 %v849, %v845
    %v1078 = vpack.c.b16 %v850, %v846
    %v1079 = vpack.c.b16 %v855, %v851
    %v1080 = vpack.c.b16 %v856, %v852
    %v1081 = vpack.c.b16 %v857, %v853
    %v1082 = vpack.c.b16 %v858, %v854
    %v1083 = vpack.c.b16 %v863, %v859
    %v1084 = vpack.c.b16 %v864, %v860
    %v1085 = vpack.c.b16 %v865, %v861
    %v1086 = vpack.c.b16 %v866, %v862
    %v1087 = vpack.c.b16 %v871, %v867
    %v1088 = vpack.c.b16 %v872, %v868
    %v1089 = vpack.c.b16 %v873, %v869
    %v1090 = vpack.c.b16 %v874, %v870
    %v1091 = vpack.c.b16 %v879, %v875
    %v1092 = vpack.c.b16 %v880, %v876
    %v1093 = vpack.c.b16 %v881, %v877
    %v1094 = vpack.c.b16 %v882, %v878
    %v1095 = vpack.c.b16 %v887, %v883
    %v1096 = vpack.c.b16 %v888, %v884
    %v1097 = vpack.c.b16 %v889, %v885
    %v1098 = vpack.c.b16 %v890, %v886
    %v1099 = vpack.c.b16 %v895, %v891
    %v1100 = vpack.c.b16 %v896, %v892
    %v1101 = vpack.c.b16 %v897, %v893
    %v1102 = vpack.c.b16 %v898, %v894
    %v1103 = vpack.c.b16 %v903, %v899
    %v1104 = vpack.c.b16 %v904, %v900
    %v1105 = vpack.c.b16 %v905, %v901
    %v1106 = vpack.c.b16 %v906, %v902
    %v1107 = vpack.c.b16 %v911, %v907
    %v1108 = vpack.c.b16 %v912, %v908
    %v1109 = vpack.c.b16 %v913, %v909
    %v1110 = vpack.c.b16 %v914, %v910
    %vm1307 = vcmask 130048
    %v1309 = vsel %vm1307, %v320, 0
    %1311 = vmatprep.subr.bf16.mxu0 %v916
    %1312 = vmatpush1.bf16.msra.mxu0 %v915
    %1313 = vmatprep.subr.bf16.mxu0 %v920
    %1314 = vmatpush1.bf16.msra.mxu0 %v919
    %1315 = vmatprep.subr.bf16.mxu0 %v924
    %1316 = vmatpush1.bf16.msra.mxu0 %v923
    %1317 = vmatprep.subr.bf16.mxu0 %v928
    %1318 = vmatpush1.bf16.msra.mxu0 %v927
    %1319 = vmatprep.subr.bf16.mxu0 %v932
    %1320 = vmatpush1.bf16.msra.mxu0 %v931
    %1321 = vmatprep.subr.bf16.mxu0 %v936
    %1322 = vmatpush1.bf16.msra.mxu0 %v935
    %1323 = vmatprep.subr.bf16.mxu0 %v940
    %1324 = vmatpush1.bf16.msra.mxu0 %v939
    %1325 = vmatprep.subr.bf16.mxu0 %v944
    %1326 = vmatpush1.bf16.msra.mxu0 %v943
    %1327 = vmatprep.subr.bf16.mxu0 %v948
    %1328 = vmatpush1.bf16.msra.mxu0 %v947
    %1329 = vmatprep.subr.bf16.mxu0 %v952
    %1330 = vmatpush1.bf16.msra.mxu0 %v951
    %1331 = vmatprep.subr.bf16.mxu0 %v956
    %1332 = vmatpush1.bf16.msra.mxu0 %v955
    %1333 = vmatprep.subr.bf16.mxu0 %v960
    %1334 = vmatpush1.bf16.msra.mxu0 %v959
    %1335 = vmatprep.subr.bf16.mxu0 %v964
    %1336 = vmatpush1.bf16.msra.mxu0 %v963
    %1337 = vmatprep.subr.bf16.mxu0 %v968
    %1338 = vmatpush1.bf16.msra.mxu0 %v967
    %1339 = vmatprep.subr.bf16.mxu0 %v972
    %1340 = vmatpush1.bf16.msra.mxu0 %v971
    %1341 = vmatprep.subr.bf16.mxu0 %v976
    %1342 = vmatpush1.bf16.msra.mxu0 %v975
    %1343 = vmatprep.mubr.bf16.mxu0 %v315
    %1344 = vmatmul.mubr.bf16.gmra.mrb[0].mxu0 %v314
    %v1345 = vpop.f32.mrb[0].mxu0
    %v1346 = vadd.f32 %v286, %v1345
    %v1347 = vpop.f32.mrb[0].mxu0
    %v1348 = vadd.f32 %v290, %v1347
    %v1349 = vpop.f32.mrb[0].mxu0
    %v1350 = vpop.f32.mrb[0].mxu0
    %1351 = vdwg.mxu0
    %1352 = vmatprep.subr.bf16.mxu0 %v980
    %1353 = vmatpush1.bf16.msra.mxu0 %v979
    %1354 = vmatprep.subr.bf16.mxu0 %v984
    %1355 = vmatpush1.bf16.msra.mxu0 %v983
    %1356 = vmatprep.subr.bf16.mxu0 %v988
    %1357 = vmatpush1.bf16.msra.mxu0 %v987
    %1358 = vmatprep.subr.bf16.mxu0 %v992
    %1359 = vmatpush1.bf16.msra.mxu0 %v991
    %1360 = vmatprep.subr.bf16.mxu0 %v996
    %1361 = vmatpush1.bf16.msra.mxu0 %v995
    %1362 = vmatprep.subr.bf16.mxu0 %v1000
    %1363 = vmatpush1.bf16.msra.mxu0 %v999
    %1364 = vmatprep.subr.bf16.mxu0 %v1004
    %1365 = vmatpush1.bf16.msra.mxu0 %v1003
    %1366 = vmatprep.subr.bf16.mxu0 %v1008
    %1367 = vmatpush1.bf16.msra.mxu0 %v1007
    %1368 = vmatprep.subr.bf16.mxu0 %v1012
    %1369 = vmatpush1.bf16.msra.mxu0 %v1011
    %1370 = vmatprep.subr.bf16.mxu0 %v1016
    %1371 = vmatpush1.bf16.msra.mxu0 %v1015
    %1372 = vmatprep.subr.bf16.mxu0 %v1020
    %1373 = vmatpush1.bf16.msra.mxu0 %v1019
    %1374 = vmatprep.subr.bf16.mxu0 %v1024
    %1375 = vmatpush1.bf16.msra.mxu0 %v1023
    %1376 = vmatprep.subr.bf16.mxu0 %v1028
    %1377 = vmatpush1.bf16.msra.mxu0 %v1027
    %1378 = vmatprep.subr.bf16.mxu0 %v1032
    %1379 = vmatpush1.bf16.msra.mxu0 %v1031
    %1380 = vmatprep.subr.bf16.mxu0 %v1036
    %1381 = vmatpush1.bf16.msra.mxu0 %v1035
    %1382 = vmatprep.subr.bf16.mxu0 %v1040
    %1383 = vmatpush1.bf16.msra.mxu0 %v1039
    %1384 = vmatprep.mubr.bf16.mxu0 %v317
    %1385 = vmatmul.mubr.bf16.gmra.mrb[0].mxu0 %v316
    %v1386 = vpop.f32.mrb[0].mxu0
    %v1387 = vadd.f32 %v1346, %v1386
    %v1388 = vpop.f32.mrb[0].mxu0
    %v1389 = vadd.f32 %v1348, %v1388
    %v1390 = vpop.f32.mrb[0].mxu0
    %v1391 = vpop.f32.mrb[0].mxu0
    %1392 = vdwg.mxu0
    %1393 = vmatprep.subr.bf16.mxu0 %v1044
    %1394 = vmatpush1.bf16.msra.mxu0 %v1043
    %1395 = vmatprep.subr.bf16.mxu0 %v1048
    %1396 = vmatpush1.bf16.msra.mxu0 %v1047
    %1397 = vmatprep.subr.bf16.mxu0 %v1052
    %1398 = vmatpush1.bf16.msra.mxu0 %v1051
    %1399 = vmatprep.subr.bf16.mxu0 %v1056
    %1400 = vmatpush1.bf16.msra.mxu0 %v1055
    %1401 = vmatprep.subr.bf16.mxu0 %v1060
    %1402 = vmatpush1.bf16.msra.mxu0 %v1059
    %1403 = vmatprep.subr.bf16.mxu0 %v1064
    %1404 = vmatpush1.bf16.msra.mxu0 %v1063
    %1405 = vmatprep.subr.bf16.mxu0 %v1068
    %1406 = vmatpush1.bf16.msra.mxu0 %v1067
    %1407 = vmatprep.subr.bf16.mxu0 %v1072
    %1408 = vmatpush1.bf16.msra.mxu0 %v1071
    %1409 = vmatprep.subr.bf16.mxu0 %v1076
    %1410 = vmatpush1.bf16.msra.mxu0 %v1075
    %1411 = vmatprep.subr.bf16.mxu0 %v1080
    %1412 = vmatpush1.bf16.msra.mxu0 %v1079
    %1413 = vmatprep.subr.bf16.mxu0 %v1084
    %1414 = vmatpush1.bf16.msra.mxu0 %v1083
    %1415 = vmatprep.subr.bf16.mxu0 %v1088
    %1416 = vmatpush1.bf16.msra.mxu0 %v1087
    %1417 = vmatprep.subr.bf16.mxu0 %v1092
    %1418 = vmatpush1.bf16.msra.mxu0 %v1091
    %1419 = vmatprep.subr.bf16.mxu0 %v1096
    %1420 = vmatpush1.bf16.msra.mxu0 %v1095
    %1421 = vmatprep.subr.bf16.mxu0 %v1100
    %1422 = vmatpush1.bf16.msra.mxu0 %v1099
    %1423 = vmatprep.subr.bf16.mxu0 %v1104
    %1424 = vmatpush1.bf16.msra.mxu0 %v1103
    %1425 = vmatprep.mubr.bf16.mxu0 %v319
    %1426 = vmatmul.mubr.bf16.gmra.mrb[0].mxu0 %v318
    %v1427 = vpop.f32.mrb[0].mxu0
    %v1428 = vadd.f32 %v1387, %v1427
    %v1429 = vpop.f32.mrb[0].mxu0
    %v1430 = vadd.f32 %v1389, %v1429
    %v1431 = vpop.f32.mrb[0].mxu0
    %v1432 = vpop.f32.mrb[0].mxu0
    %1433 = vdwg.mxu0
    %1434 = vmatprep.subr.bf16.mxu0 %v1108
    %1435 = vmatpush1.bf16.msra.mxu0 %v1107
    %1436 = vmatprep.subr.bf16.mxu0 0
    %1437 = vmatpush1.bf16.msra.mxu0 0
    %1438 = vmatprep.subr.bf16.mxu0 0
    %1439 = vmatpush1.bf16.msra.mxu0 0
    %1440 = vmatprep.subr.bf16.mxu0 0
    %1441 = vmatpush1.bf16.msra.mxu0 0
    %1442 = vmatprep.subr.bf16.mxu0 0
    %1443 = vmatpush1.bf16.msra.mxu0 0
    %1444 = vmatprep.subr.bf16.mxu0 0
    %1445 = vmatpush1.bf16.msra.mxu0 0
    %1446 = vmatprep.subr.bf16.mxu0 0
    %1447 = vmatpush1.bf16.msra.mxu0 0
    %1448 = vmatprep.subr.bf16.mxu0 0
    %1449 = vmatpush1.bf16.msra.mxu0 0
    %1450 = vmatprep.subr.bf16.mxu0 0
    %1451 = vmatpush1.bf16.msra.mxu0 0
    %1452 = vmatprep.subr.bf16.mxu0 0
    %1453 = vmatpush1.bf16.msra.mxu0 0
    %1454 = vmatprep.subr.bf16.mxu0 0
    %1455 = vmatpush1.bf16.msra.mxu0 0
    %1456 = vmatprep.subr.bf16.mxu0 0
    %1457 = vmatpush1.bf16.msra.mxu0 0
    %1458 = vmatprep.subr.bf16.mxu0 0
    %1459 = vmatpush1.bf16.msra.mxu0 0
    %1460 = vmatprep.subr.bf16.mxu0 0
    %1461 = vmatpush1.bf16.msra.mxu0 0
    %1462 = vmatprep.subr.bf16.mxu0 0
    %1463 = vmatpush1.bf16.msra.mxu0 0
    %1464 = vmatprep.subr.bf16.mxu0 0
    %1465 = vmatpush1.bf16.msra.mxu0 0
    %1466 = vmatprep.mubr.bf16.mxu0 0
    %1467 = vmatmul.mubr.bf16.gmra.mrb[0].mxu0 %v1309
    %v1468 = vpop.f32.mrb[0].mxu0
    %v1469 = vadd.f32 %v1428, %v1468
    %v1470 = vpop.f32.mrb[0].mxu0
    %v1471 = vadd.f32 %v1430, %v1470
    %v1472 = vpop.f32.mrb[0].mxu0
    %v1473 = vpop.f32.mrb[0].mxu0
    %1474 = vdwg.mxu0
    %1475 = vmatprep.subr.bf16.mxu0 %v918
    %1476 = vmatpush1.bf16.msra.mxu0 %v917
    %1477 = vmatprep.subr.bf16.mxu0 %v922
    %1478 = vmatpush1.bf16.msra.mxu0 %v921
    %1479 = vmatprep.subr.bf16.mxu0 %v926
    %1480 = vmatpush1.bf16.msra.mxu0 %v925
    %1481 = vmatprep.subr.bf16.mxu0 %v930
    %1482 = vmatpush1.bf16.msra.mxu0 %v929
    %1483 = vmatprep.subr.bf16.mxu0 %v934
    %1484 = vmatpush1.bf16.msra.mxu0 %v933
    %1485 = vmatprep.subr.bf16.mxu0 %v938
    %1486 = vmatpush1.bf16.msra.mxu0 %v937
    %1487 = vmatprep.subr.bf16.mxu0 %v942
    %1488 = vmatpush1.bf16.msra.mxu0 %v941
    %1489 = vmatprep.subr.bf16.mxu0 %v946
    %1490 = vmatpush1.bf16.msra.mxu0 %v945
    %1491 = vmatprep.subr.bf16.mxu0 %v950
    %1492 = vmatpush1.bf16.msra.mxu0 %v949
    %1493 = vmatprep.subr.bf16.mxu0 %v954
    %1494 = vmatpush1.bf16.msra.mxu0 %v953
    %1495 = vmatprep.subr.bf16.mxu0 %v958
    %1496 = vmatpush1.bf16.msra.mxu0 %v957
    %1497 = vmatprep.subr.bf16.mxu0 %v962
    %1498 = vmatpush1.bf16.msra.mxu0 %v961
    %1499 = vmatprep.subr.bf16.mxu0 %v966
    %1500 = vmatpush1.bf16.msra.mxu0 %v965
    %1501 = vmatprep.subr.bf16.mxu0 %v970
    %1502 = vmatpush1.bf16.msra.mxu0 %v969
    %1503 = vmatprep.subr.bf16.mxu0 %v974
    %1504 = vmatpush1.bf16.msra.mxu0 %v973
    %1505 = vmatprep.subr.bf16.mxu0 %v978
    %1506 = vmatpush1.bf16.msra.mxu0 %v977
    %1507 = vmatprep.mubr.bf16.mxu0 %v315
    %1508 = vmatmul.mubr.bf16.gmra.mrb[0].mxu0 %v314
    %v1509 = vpop.f32.mrb[0].mxu0
    %v1510 = vadd.f32 %v294, %v1509
    %v1511 = vpop.f32.mrb[0].mxu0
    %v1512 = vadd.f32 %v298, %v1511
    %v1513 = vpop.f32.mrb[0].mxu0
    %v1514 = vpop.f32.mrb[0].mxu0
    %1515 = vdwg.mxu0
    %1516 = vmatprep.subr.bf16.mxu0 %v982
    %1517 = vmatpush1.bf16.msra.mxu0 %v981
    %1518 = vmatprep.subr.bf16.mxu0 %v986
    %1519 = vmatpush1.bf16.msra.mxu0 %v985
    %1520 = vmatprep.subr.bf16.mxu0 %v990
    %1521 = vmatpush1.bf16.msra.mxu0 %v989
    %1522 = vmatprep.subr.bf16.mxu0 %v994
    %1523 = vmatpush1.bf16.msra.mxu0 %v993
    %1524 = vmatprep.subr.bf16.mxu0 %v998
    %1525 = vmatpush1.bf16.msra.mxu0 %v997
    %1526 = vmatprep.subr.bf16.mxu0 %v1002
    %1527 = vmatpush1.bf16.msra.mxu0 %v1001
    %1528 = vmatprep.subr.bf16.mxu0 %v1006
    %1529 = vmatpush1.bf16.msra.mxu0 %v1005
    %1530 = vmatprep.subr.bf16.mxu0 %v1010
    %1531 = vmatpush1.bf16.msra.mxu0 %v1009
    %1532 = vmatprep.subr.bf16.mxu0 %v1014
    %1533 = vmatpush1.bf16.msra.mxu0 %v1013
    %1534 = vmatprep.subr.bf16.mxu0 %v1018
    %1535 = vmatpush1.bf16.msra.mxu0 %v1017
    %1536 = vmatprep.subr.bf16.mxu0 %v1022
    %1537 = vmatpush1.bf16.msra.mxu0 %v1021
    %1538 = vmatprep.subr.bf16.mxu0 %v1026
    %1539 = vmatpush1.bf16.msra.mxu0 %v1025
    %1540 = vmatprep.subr.bf16.mxu0 %v1030
    %1541 = vmatpush1.bf16.msra.mxu0 %v1029
    %1542 = vmatprep.subr.bf16.mxu0 %v1034
    %1543 = vmatpush1.bf16.msra.mxu0 %v1033
    %1544 = vmatprep.subr.bf16.mxu0 %v1038
    %1545 = vmatpush1.bf16.msra.mxu0 %v1037
    %1546 = vmatprep.subr.bf16.mxu0 %v1042
    %1547 = vmatpush1.bf16.msra.mxu0 %v1041
    %1548 = vmatprep.mubr.bf16.mxu0 %v317
    %1549 = vmatmul.mubr.bf16.gmra.mrb[0].mxu0 %v316
    %v1550 = vpop.f32.mrb[0].mxu0
    %v1551 = vadd.f32 %v1510, %v1550
    %v1552 = vpop.f32.mrb[0].mxu0
    %v1553 = vadd.f32 %v1512, %v1552
    %v1554 = vpop.f32.mrb[0].mxu0
    %v1555 = vpop.f32.mrb[0].mxu0
    %1556 = vdwg.mxu0
    %1557 = vmatprep.subr.bf16.mxu0 %v1046
    %1558 = vmatpush1.bf16.msra.mxu0 %v1045
    %1559 = vmatprep.subr.bf16.mxu0 %v1050
    %1560 = vmatpush1.bf16.msra.mxu0 %v1049
    %1561 = vmatprep.subr.bf16.mxu0 %v1054
    %1562 = vmatpush1.bf16.msra.mxu0 %v1053
    %1563 = vmatprep.subr.bf16.mxu0 %v1058
    %1564 = vmatpush1.bf16.msra.mxu0 %v1057
    %1565 = vmatprep.subr.bf16.mxu0 %v1062
    %1566 = vmatpush1.bf16.msra.mxu0 %v1061
    %1567 = vmatprep.subr.bf16.mxu0 %v1066
    %1568 = vmatpush1.bf16.msra.mxu0 %v1065
    %1569 = vmatprep.subr.bf16.mxu0 %v1070
    %1570 = vmatpush1.bf16.msra.mxu0 %v1069
    %1571 = vmatprep.subr.bf16.mxu0 %v1074
    %1572 = vmatpush1.bf16.msra.mxu0 %v1073
    %1573 = vmatprep.subr.bf16.mxu0 %v1078
    %1574 = vmatpush1.bf16.msra.mxu0 %v1077
    %1575 = vmatprep.subr.bf16.mxu0 %v1082
    %1576 = vmatpush1.bf16.msra.mxu0 %v1081
    %1577 = vmatprep.subr.bf16.mxu0 %v1086
    %1578 = vmatpush1.bf16.msra.mxu0 %v1085
    %1579 = vmatprep.subr.bf16.mxu0 %v1090
    %1580 = vmatpush1.bf16.msra.mxu0 %v1089
    %1581 = vmatprep.subr.bf16.mxu0 %v1094
    %1582 = vmatpush1.bf16.msra.mxu0 %v1093
    %1583 = vmatprep.subr.bf16.mxu0 %v1098
    %1584 = vmatpush1.bf16.msra.mxu0 %v1097
    %1585 = vmatprep.subr.bf16.mxu0 %v1102
    %1586 = vmatpush1.bf16.msra.mxu0 %v1101
    %1587 = vmatprep.subr.bf16.mxu0 %v1106
    %1588 = vmatpush1.bf16.msra.mxu0 %v1105
    %1589 = vmatprep.mubr.bf16.mxu0 %v319
    %1590 = vmatmul.mubr.bf16.gmra.mrb[0].mxu0 %v318
    %v1591 = vpop.f32.mrb[0].mxu0
    %v1592 = vadd.f32 %v1551, %v1591
    %v1593 = vpop.f32.mrb[0].mxu0
    %v1594 = vadd.f32 %v1553, %v1593
    %v1595 = vpop.f32.mrb[0].mxu0
    %v1596 = vpop.f32.mrb[0].mxu0
    %1597 = vdwg.mxu0
    %1598 = vmatprep.subr.bf16.mxu0 %v1110
    %1599 = vmatpush1.bf16.msra.mxu0 %v1109
    %1600 = vmatprep.subr.bf16.mxu0 0
    %1601 = vmatpush1.bf16.msra.mxu0 0
    %1602 = vmatprep.subr.bf16.mxu0 0
    %1603 = vmatpush1.bf16.msra.mxu0 0
    %1604 = vmatprep.subr.bf16.mxu0 0
    %1605 = vmatpush1.bf16.msra.mxu0 0
    %1606 = vmatprep.subr.bf16.mxu0 0
    %1607 = vmatpush1.bf16.msra.mxu0 0
    %1608 = vmatprep.subr.bf16.mxu0 0
    %1609 = vmatpush1.bf16.msra.mxu0 0
    %1610 = vmatprep.subr.bf16.mxu0 0
    %1611 = vmatpush1.bf16.msra.mxu0 0
    %1612 = vmatprep.subr.bf16.mxu0 0
    %1613 = vmatpush1.bf16.msra.mxu0 0
    %1614 = vmatprep.subr.bf16.mxu0 0
    %1615 = vmatpush1.bf16.msra.mxu0 0
    %1616 = vmatprep.subr.bf16.mxu0 0
    %1617 = vmatpush1.bf16.msra.mxu0 0
    %1618 = vmatprep.subr.bf16.mxu0 0
    %1619 = vmatpush1.bf16.msra.mxu0 0
    %1620 = vmatprep.subr.bf16.mxu0 0
    %1621 = vmatpush1.bf16.msra.mxu0 0
    %1622 = vmatprep.subr.bf16.mxu0 0
    %1623 = vmatpush1.bf16.msra.mxu0 0
    %1624 = vmatprep.subr.bf16.mxu0 0
    %1625 = vmatpush1.bf16.msra.mxu0 0
    %1626 = vmatprep.subr.bf16.mxu0 0
    %1627 = vmatpush1.bf16.msra.mxu0 0
    %1628 = vmatprep.subr.bf16.mxu0 0
    %1629 = vmatpush1.bf16.msra.mxu0 0
    %1630 = vmatprep.mubr.bf16.mxu0 0
    %1631 = vmatmul.mubr.bf16.gmra.mrb[0].mxu0 %v1309
    %v1632 = vpop.f32.mrb[0].mxu0
    %v1633 = vadd.f32 %v1592, %v1632
    %v1634 = vpop.f32.mrb[0].mxu0
    %v1635 = vadd.f32 %v1594, %v1634
    %v1636 = vpop.f32.mrb[0].mxu0
    %v1637 = vpop.f32.mrb[0].mxu0
    %1638 = vdwg.mxu0
    %v1639 = vmax.f32 %v1469, 0.0
    %v1640 = vmax.f32 %v1471, 0.0
    %v1641 = vmax.f32 %v1633, 0.0
    %v1642 = vmax.f32 %v1635, 0.0
    %v1643 = vpack.c.bf16 %v1639, %v1639
    %v1644 = vpack.c.bf16 %v1640, %v1640
    %v1645 = vpack.c.bf16 %v1641, %v1641
    %v1646 = vpack.c.bf16 %v1642, %v1642
    %v1647 = vld [vmem:[#allocation7] sm:$0xf]
    %v1648 = vld [vmem:[#allocation7 + $0x4] sm:$0xf]
    %v1649 = vld [vmem:[#allocation7 + $0x8] sm:$0xf]
    %v1650 = vld [vmem:[#allocation7 + $0xc] sm:$0xf]
    %v1651 = vld [vmem:[#allocation7 + $0x10] sm:$0xf]
    %v1652 = vld [vmem:[#allocation7 + $0x14] sm:$0xf]
    %v1653 = vld [vmem:[#allocation7 + $0x18] sm:$0xf]
    %v1654 = vld [vmem:[#allocation7 + $0x1c] sm:$0xf]
    %v1655 = vld [vmem:[#allocation7 + $0x20] sm:$0xf]
    %v1656 = vld [vmem:[#allocation7 + $0x24] sm:$0xf]
    %v1657 = vld [vmem:[#allocation7 + $0x28] sm:$0xf]
    %v1658 = vld [vmem:[#allocation7 + $0x2c] sm:$0xf]
    %v1659 = vld [vmem:[#allocation7 + $0x30] sm:$0xf]
    %v1660 = vld [vmem:[#allocation7 + $0x34] sm:$0xf]
    %v1661 = vld [vmem:[#allocation7 + $0x38] sm:$0xf]
    %v1662 = vld [vmem:[#allocation7 + $0x3c] sm:$0xf]
    %v1663 = vld [vmem:[#allocation7 + $0x40] sm:$0xf]
    %v1664 = vld [vmem:[#allocation7 + $0x44] sm:$0xf]
    %v1665 = vld [vmem:[#allocation7 + $0x48] sm:$0xf]
    %v1666 = vld [vmem:[#allocation7 + $0x4c] sm:$0xf]
    %v1667 = vld [vmem:[#allocation7 + $0x50] sm:$0xf]
    %v1668 = vld [vmem:[#allocation7 + $0x54] sm:$0xf]
    %v1669 = vld [vmem:[#allocation7 + $0x58] sm:$0xf]
    %v1670 = vld [vmem:[#allocation7 + $0x5c] sm:$0xf]
    %v1671 = vld [vmem:[#allocation7 + $0x60] sm:$0xf]
    %v1672 = vld [vmem:[#allocation7 + $0x64] sm:$0xf]
    %v1673 = vld [vmem:[#allocation7 + $0x68] sm:$0xf]
    %v1674 = vld [vmem:[#allocation7 + $0x6c] sm:$0xf]
    %v1675 = vld [vmem:[#allocation7 + $0x70] sm:$0xf]
    %v1676 = vld [vmem:[#allocation7 + $0x74] sm:$0xf]
    %v1677 = vld [vmem:[#allocation7 + $0x78] sm:$0xf]
    %v1678 = vld [vmem:[#allocation7 + $0x7c] sm:$0xf]
    %v1679 = vld [vmem:[#allocation7 + $0x80] sm:$0xf]
    %v1680 = vld [vmem:[#allocation7 + $0x84] sm:$0xf]
    %v1681 = vld [vmem:[#allocation7 + $0x88] sm:$0xf]
    %v1682 = vld [vmem:[#allocation7 + $0x8c] sm:$0xf]
    %v1683 = vld [vmem:[#allocation7 + $0x90] sm:$0xf]
    %v1684 = vld [vmem:[#allocation7 + $0x94] sm:$0xf]
    %v1685 = vld [vmem:[#allocation7 + $0x98] sm:$0xf]
    %v1686 = vld [vmem:[#allocation7 + $0x9c] sm:$0xf]
    %v1687 = vld [vmem:[#allocation7 + $0xa0] sm:$0xf]
    %v1688 = vld [vmem:[#allocation7 + $0xa4] sm:$0xf]
    %v1689 = vld [vmem:[#allocation7 + $0xa8] sm:$0xf]
    %v1690 = vld [vmem:[#allocation7 + $0xac] sm:$0xf]
    %v1691 = vld [vmem:[#allocation7 + $0xb0] sm:$0xf]
    %v1692 = vld [vmem:[#allocation7 + $0xb4] sm:$0xf]
    %v1693 = vld [vmem:[#allocation7 + $0xb8] sm:$0xf]
    %v1694 = vld [vmem:[#allocation7 + $0xbc] sm:$0xf]
    %v1695 = vld [vmem:[#allocation7 + $0xc0] sm:$0xf]
    %v1696 = vld [vmem:[#allocation7 + $0xc4] sm:$0xf]
    %v1697 = vld [vmem:[#allocation7 + $0xc8] sm:$0xf]
    %v1698 = vld [vmem:[#allocation7 + $0xcc] sm:$0xf]
    %v1699 = vld [vmem:[#allocation7 + $0xd0] sm:$0xf]
    %v1700 = vld [vmem:[#allocation7 + $0xd4] sm:$0xf]
    %v1701 = vld [vmem:[#allocation7 + $0xd8] sm:$0xf]
    %v1702 = vld [vmem:[#allocation7 + $0xdc] sm:$0xf]
    %v1703 = vld [vmem:[#allocation7 + $0xe0] sm:$0xf]
    %v1704 = vld [vmem:[#allocation7 + $0xe4] sm:$0xf]
    %v1705 = vld [vmem:[#allocation7 + $0xe8] sm:$0xf]
    %v1706 = vld [vmem:[#allocation7 + $0xec] sm:$0xf]
    %v1707 = vld [vmem:[#allocation7 + $0xf0] sm:$0xf]
    %v1708 = vld [vmem:[#allocation7 + $0xf4] sm:$0xf]
    %v1709 = vld [vmem:[#allocation7 + $0xf8] sm:$0xf]
    %v1710 = vld [vmem:[#allocation7 + $0xfc] sm:$0xf]
    %v1711 = vld [vmem:[%s4] sm:$0x1]
    %v1713 = vlaneseq
    %v1714 = vshrl.u32 %v1713, 7
    %v1715 = vsub.s32 0, %v1714
    %v1716 = vrot.slane %v1711, %v1715
    %v1782 = vunpack.c.l.b16 %v1647
    %v1783 = vunpack.c.l.b16 %v1648
    %v1784 = vunpack.c.l.b16 %v1649
    %v1785 = vunpack.c.l.b16 %v1650
    %v1786 = vunpack.c.l.b16 %v1651
    %v1787 = vunpack.c.l.b16 %v1652
    %v1788 = vunpack.c.l.b16 %v1653
    %v1789 = vunpack.c.l.b16 %v1654
    %v1790 = vunpack.c.l.b16 %v1655
    %v1791 = vunpack.c.l.b16 %v1656
    %v1792 = vunpack.c.l.b16 %v1657
    %v1793 = vunpack.c.l.b16 %v1658
    %v1794 = vunpack.c.l.b16 %v1659
    %v1795 = vunpack.c.l.b16 %v1660
    %v1796 = vunpack.c.l.b16 %v1661
    %v1797 = vunpack.c.l.b16 %v1662
    %v1798 = vunpack.c.l.b16 %v1663
    %v1799 = vunpack.c.l.b16 %v1664
    %v1800 = vunpack.c.l.b16 %v1665
    %v1801 = vunpack.c.l.b16 %v1666
    %v1802 = vunpack.c.l.b16 %v1667
    %v1803 = vunpack.c.l.b16 %v1668
    %v1804 = vunpack.c.l.b16 %v1669
    %v1805 = vunpack.c.l.b16 %v1670
    %v1806 = vunpack.c.l.b16 %v1671
    %v1807 = vunpack.c.l.b16 %v1672
    %v1808 = vunpack.c.l.b16 %v1673
    %v1809 = vunpack.c.l.b16 %v1674
    %v1810 = vunpack.c.l.b16 %v1675
    %v1811 = vunpack.c.l.b16 %v1676
    %v1812 = vunpack.c.l.b16 %v1677
    %v1813 = vunpack.c.l.b16 %v1678
    %v1814 = vunpack.c.l.b16 %v1679
    %v1815 = vunpack.c.l.b16 %v1680
    %v1816 = vunpack.c.l.b16 %v1681
    %v1817 = vunpack.c.l.b16 %v1682
    %v1818 = vunpack.c.l.b16 %v1683
    %v1819 = vunpack.c.l.b16 %v1684
    %v1820 = vunpack.c.l.b16 %v1685
    %v1821 = vunpack.c.l.b16 %v1686
    %v1822 = vunpack.c.l.b16 %v1687
    %v1823 = vunpack.c.l.b16 %v1688
    %v1824 = vunpack.c.l.b16 %v1689
    %v1825 = vunpack.c.l.b16 %v1690
    %v1826 = vunpack.c.l.b16 %v1691
    %v1827 = vunpack.c.l.b16 %v1692
    %v1828 = vunpack.c.l.b16 %v1693
    %v1829 = vunpack.c.l.b16 %v1694
    %v1830 = vunpack.c.l.b16 %v1695
    %v1831 = vunpack.c.l.b16 %v1696
    %v1832 = vunpack.c.l.b16 %v1697
    %v1833 = vunpack.c.l.b16 %v1698
    %v1834 = vunpack.c.l.b16 %v1699
    %v1835 = vunpack.c.l.b16 %v1700
    %v1836 = vunpack.c.l.b16 %v1701
    %v1837 = vunpack.c.l.b16 %v1702
    %v1838 = vunpack.c.l.b16 %v1703
    %v1839 = vunpack.c.l.b16 %v1704
    %v1840 = vunpack.c.l.b16 %v1705
    %v1841 = vunpack.c.l.b16 %v1706
    %v1842 = vunpack.c.l.b16 %v1707
    %v1843 = vunpack.c.l.b16 %v1708
    %v1844 = vunpack.c.l.b16 %v1709
    %v1845 = vunpack.c.l.b16 %v1710
    %v1846 = vpack.c.b16 %v1783, %v1782
    %v1847 = vpack.c.b16 %v1785, %v1784
    %v1848 = vpack.c.b16 %v1787, %v1786
    %v1849 = vpack.c.b16 %v1789, %v1788
    %v1850 = vpack.c.b16 %v1791, %v1790
    %v1851 = vpack.c.b16 %v1793, %v1792
    %v1852 = vpack.c.b16 %v1795, %v1794
    %v1853 = vpack.c.b16 %v1797, %v1796
    %v1854 = vpack.c.b16 %v1799, %v1798
    %v1855 = vpack.c.b16 %v1801, %v1800
    %v1856 = vpack.c.b16 %v1803, %v1802
    %v1857 = vpack.c.b16 %v1805, %v1804
    %v1858 = vpack.c.b16 %v1807, %v1806
    %v1859 = vpack.c.b16 %v1809, %v1808
    %v1860 = vpack.c.b16 %v1811, %v1810
    %v1861 = vpack.c.b16 %v1813, %v1812
    %v1862 = vpack.c.b16 %v1815, %v1814
    %v1863 = vpack.c.b16 %v1817, %v1816
    %v1864 = vpack.c.b16 %v1819, %v1818
    %v1865 = vpack.c.b16 %v1821, %v1820
    %v1866 = vpack.c.b16 %v1823, %v1822
    %v1867 = vpack.c.b16 %v1825, %v1824
    %v1868 = vpack.c.b16 %v1827, %v1826
    %v1869 = vpack.c.b16 %v1829, %v1828
    %v1870 = vpack.c.b16 %v1831, %v1830
    %v1871 = vpack.c.b16 %v1833, %v1832
    %v1872 = vpack.c.b16 %v1835, %v1834
    %v1873 = vpack.c.b16 %v1837, %v1836
    %v1874 = vpack.c.b16 %v1839, %v1838
    %v1875 = vpack.c.b16 %v1841, %v1840
    %v1876 = vpack.c.b16 %v1843, %v1842
    %v1877 = vpack.c.b16 %v1845, %v1844
    %1910 = vmatprep.subr.bf16.mxu0 0
    %1911 = vmatpush1.bf16.msra.mxu0 %v1846
    %1912 = vmatprep.subr.bf16.mxu0 0
    %1913 = vmatpush1.bf16.msra.mxu0 %v1847
    %1914 = vmatprep.subr.bf16.mxu0 0
    %1915 = vmatpush1.bf16.msra.mxu0 %v1848
    %1916 = vmatprep.subr.bf16.mxu0 0
    %1917 = vmatpush1.bf16.msra.mxu0 %v1849
    %1918 = vmatprep.subr.bf16.mxu0 0
    %1919 = vmatpush1.bf16.msra.mxu0 %v1850
    %1920 = vmatprep.subr.bf16.mxu0 0
    %1921 = vmatpush1.bf16.msra.mxu0 %v1851
    %1922 = vmatprep.subr.bf16.mxu0 0
    %1923 = vmatpush1.bf16.msra.mxu0 %v1852
    %1924 = vmatprep.subr.bf16.mxu0 0
    %1925 = vmatpush1.bf16.msra.mxu0 %v1853
    %1926 = vmatprep.subr.bf16.mxu0 0
    %1927 = vmatpush1.bf16.msra.mxu0 %v1854
    %1928 = vmatprep.subr.bf16.mxu0 0
    %1929 = vmatpush1.bf16.msra.mxu0 %v1855
    %1930 = vmatprep.subr.bf16.mxu0 0
    %1931 = vmatpush1.bf16.msra.mxu0 %v1856
    %1932 = vmatprep.subr.bf16.mxu0 0
    %1933 = vmatpush1.bf16.msra.mxu0 %v1857
    %1934 = vmatprep.subr.bf16.mxu0 0
    %1935 = vmatpush1.bf16.msra.mxu0 %v1858
    %1936 = vmatprep.subr.bf16.mxu0 0
    %1937 = vmatpush1.bf16.msra.mxu0 %v1859
    %1938 = vmatprep.subr.bf16.mxu0 0
    %1939 = vmatpush1.bf16.msra.mxu0 %v1860
    %1940 = vmatprep.subr.bf16.mxu0 0
    %1941 = vmatpush1.bf16.msra.mxu0 %v1861
    %1942 = vmatprep.mubr.bf16.mxu0 %v1644
    %1943 = vmatmul.mubr.bf16.gmra.mrb[0].mxu0 %v1643
    %v1944 = vpop.f32.mrb[0].mxu0
    %v1945 = vadd.f32 %v1716, %v1944
    %v1946 = vpop.f32.mrb[0].mxu0
    %v1947 = vpop.f32.mrb[0].mxu0
    %v1948 = vpop.f32.mrb[0].mxu0
    %1949 = vdwg.mxu0
    %1950 = vmatprep.subr.bf16.mxu0 0
    %1951 = vmatpush1.bf16.msra.mxu0 %v1862
    %1952 = vmatprep.subr.bf16.mxu0 0
    %1953 = vmatpush1.bf16.msra.mxu0 %v1863
    %1954 = vmatprep.subr.bf16.mxu0 0
    %1955 = vmatpush1.bf16.msra.mxu0 %v1864
    %1956 = vmatprep.subr.bf16.mxu0 0
    %1957 = vmatpush1.bf16.msra.mxu0 %v1865
    %1958 = vmatprep.subr.bf16.mxu0 0
    %1959 = vmatpush1.bf16.msra.mxu0 %v1866
    %1960 = vmatprep.subr.bf16.mxu0 0
    %1961 = vmatpush1.bf16.msra.mxu0 %v1867
    %1962 = vmatprep.subr.bf16.mxu0 0
    %1963 = vmatpush1.bf16.msra.mxu0 %v1868
    %1964 = vmatprep.subr.bf16.mxu0 0
    %1965 = vmatpush1.bf16.msra.mxu0 %v1869
    %1966 = vmatprep.subr.bf16.mxu0 0
    %1967 = vmatpush1.bf16.msra.mxu0 %v1870
    %1968 = vmatprep.subr.bf16.mxu0 0
    %1969 = vmatpush1.bf16.msra.mxu0 %v1871
    %1970 = vmatprep.subr.bf16.mxu0 0
    %1971 = vmatpush1.bf16.msra.mxu0 %v1872
    %1972 = vmatprep.subr.bf16.mxu0 0
    %1973 = vmatpush1.bf16.msra.mxu0 %v1873
    %1974 = vmatprep.subr.bf16.mxu0 0
    %1975 = vmatpush1.bf16.msra.mxu0 %v1874
    %1976 = vmatprep.subr.bf16.mxu0 0
    %1977 = vmatpush1.bf16.msra.mxu0 %v1875
    %1978 = vmatprep.subr.bf16.mxu0 0
    %1979 = vmatpush1.bf16.msra.mxu0 %v1876
    %1980 = vmatprep.subr.bf16.mxu0 0
    %1981 = vmatpush1.bf16.msra.mxu0 %v1877
    %1982 = vmatprep.mubr.bf16.mxu0 %v1646
    %1983 = vmatmul.mubr.bf16.gmra.mrb[0].mxu0 %v1645
    %v1984 = vpop.f32.mrb[0].mxu0
    %v1985 = vadd.f32 %v1945, %v1984
    %v1986 = vpop.f32.mrb[0].mxu0
    %v1987 = vpop.f32.mrb[0].mxu0
    %v1988 = vpop.f32.mrb[0].mxu0
    %1989 = vdwg.mxu0
    %v1990 = vmax.f32 %v1985, 0.0
    %v1991 = vpack.c.bf16 %v1990, %v1990
    %v1992 = vld [vmem:[#allocation8] sm:$0xf]
    %v1993 = vld [vmem:[#allocation8 + $0x4] sm:$0xf]
    %v1994 = vld [vmem:[#allocation8 + $0x8] sm:$0xf]
    %v1995 = vld [vmem:[#allocation8 + $0xc] sm:$0xf]
    %v1996 = vld [vmem:[#allocation8 + $0x10] sm:$0xf]
    %v1997 = vld [vmem:[#allocation8 + $0x14] sm:$0xf]
    %v1998 = vld [vmem:[#allocation8 + $0x18] sm:$0xf]
    %v1999 = vld [vmem:[#allocation8 + $0x1c] sm:$0xf]
    %v2000 = vld [vmem:[#allocation8 + $0x20] sm:$0xf]
    %v2001 = vld [vmem:[#allocation8 + $0x24] sm:$0xf]
    %v2002 = vld [vmem:[#allocation8 + $0x28] sm:$0xf]
    %v2003 = vld [vmem:[#allocation8 + $0x2c] sm:$0xf]
    %v2004 = vld [vmem:[#allocation8 + $0x30] sm:$0xf]
    %v2005 = vld [vmem:[#allocation8 + $0x34] sm:$0xf]
    %v2006 = vld [vmem:[#allocation8 + $0x38] sm:$0xf]
    %v2007 = vld [vmem:[#allocation8 + $0x3c] sm:$0xf]
    %v2008 = vld [vmem:[%s6] sm:$0x1]
    %v2010 = vlaneseq
    %v2011 = vshrl.u32 %v2010, 7
    %v2012 = vsub.s32 0, %v2011
    %v2013 = vrot.slane %v2008, %v2012
    %v2031 = vunpack.c.l.b16 %v1992
    %v2032 = vunpack.c.l.b16 %v1993
    %v2033 = vunpack.c.l.b16 %v1994
    %v2034 = vunpack.c.l.b16 %v1995
    %v2035 = vunpack.c.l.b16 %v1996
    %v2036 = vunpack.c.l.b16 %v1997
    %v2037 = vunpack.c.l.b16 %v1998
    %v2038 = vunpack.c.l.b16 %v1999
    %v2039 = vunpack.c.l.b16 %v2000
    %v2040 = vunpack.c.l.b16 %v2001
    %v2041 = vunpack.c.l.b16 %v2002
    %v2042 = vunpack.c.l.b16 %v2003
    %v2043 = vunpack.c.l.b16 %v2004
    %v2044 = vunpack.c.l.b16 %v2005
    %v2045 = vunpack.c.l.b16 %v2006
    %v2046 = vunpack.c.l.b16 %v2007
    %v2047 = vpack.c.b16 %v2032, %v2031
    %v2048 = vpack.c.b16 %v2034, %v2033
    %v2049 = vpack.c.b16 %v2036, %v2035
    %v2050 = vpack.c.b16 %v2038, %v2037
    %v2051 = vpack.c.b16 %v2040, %v2039
    %v2052 = vpack.c.b16 %v2042, %v2041
    %v2053 = vpack.c.b16 %v2044, %v2043
    %v2054 = vpack.c.b16 %v2046, %v2045
    %2063 = vmatprep.subr.bf16.mxu0 0
    %2064 = vmatpush1.bf16.msra.mxu0 %v2047
    %2065 = vmatprep.subr.bf16.mxu0 0
    %2066 = vmatpush1.bf16.msra.mxu0 %v2048
    %2067 = vmatprep.subr.bf16.mxu0 0
    %2068 = vmatpush1.bf16.msra.mxu0 %v2049
    %2069 = vmatprep.subr.bf16.mxu0 0
    %2070 = vmatpush1.bf16.msra.mxu0 %v2050
    %2071 = vmatprep.subr.bf16.mxu0 0
    %2072 = vmatpush1.bf16.msra.mxu0 %v2051
    %2073 = vmatprep.subr.bf16.mxu0 0
    %2074 = vmatpush1.bf16.msra.mxu0 %v2052
    %2075 = vmatprep.subr.bf16.mxu0 0
    %2076 = vmatpush1.bf16.msra.mxu0 %v2053
    %2077 = vmatprep.subr.bf16.mxu0 0
    %2078 = vmatpush1.bf16.msra.mxu0 %v2054
    %2079 = vmatprep.subr.bf16.mxu0 0
    %2080 = vmatpush1.bf16.msra.mxu0 0
    %2081 = vmatprep.subr.bf16.mxu0 0
    %2082 = vmatpush1.bf16.msra.mxu0 0
    %2083 = vmatprep.subr.bf16.mxu0 0
    %2084 = vmatpush1.bf16.msra.mxu0 0
    %2085 = vmatprep.subr.bf16.mxu0 0
    %2086 = vmatpush1.bf16.msra.mxu0 0
    %2087 = vmatprep.subr.bf16.mxu0 0
    %2088 = vmatpush1.bf16.msra.mxu0 0
    %2089 = vmatprep.subr.bf16.mxu0 0
    %2090 = vmatpush1.bf16.msra.mxu0 0
    %2091 = vmatprep.subr.bf16.mxu0 0
    %2092 = vmatpush1.bf16.msra.mxu0 0
    %2093 = vmatprep.subr.bf16.mxu0 0
    %2094 = vmatpush1.bf16.msra.mxu0 0
    %2095 = vmatprep.mubr.bf16.mxu0 0
    %2096 = vmatmul.mubr.bf16.gmra.mrb[0].mxu0 %v1991
    %v2097 = vpop.f32.mrb[0].mxu0
    %v2098 = vadd.f32 %v2013, %v2097
    %v2099 = vpop.f32.mrb[0].mxu0
    %v2100 = vpop.f32.mrb[0].mxu0
    %v2101 = vpop.f32.mrb[0].mxu0
    %2102 = vdwg.mxu0
    %2103 = vmax.xlane.f32.xlu0 %v2098
    %v2104 = vpop.xlane.xlu0 %2103
    %v2105 = vsub.f32 %v2098, %v2104
    %v2106 = vmul.f32 %v2105, 1.442695
    %v2107 = vpow.pop %v2106
    %2108 = vadd.xlane.f32.xlu0 %v2107
    %v2109 = vpop.xlane.xlu0 %2108
    %v2110 = vrcp.pop %v2109
    %v2111 = vmul.f32 %v2107, %v2110
    %2112 = vst [vmem:[#allocation10] sm:$0xff] %v2111
    // Predicated region
    $region46: #{tpu_custom_call.1} parent=1 // pred_check
      _
    $region47: #{tpu_custom_call.1} parent=1 // pred_check_branch
      %2114 = sbr.rel (0) target = $region49
    $region48: #{tpu_custom_call.1} parent=1 // pred_region
      %s2116 = ssub.s32 128, 128
      %2117 = vsyncadd [#allocation4], %s2116
      %s2119 = sshll.u32 [#allocation10], 4
      %s2120 = int_to_ptr.vmem [resolvable:$true] %s2119
      %2122 = dma.vmem_to_hbm [thread:$0]  %s2120, 128, %s7, [#allocation4]
    $region49: #{tpu_custom_call.1} parent=1 // pred_fallthru
      _
    // Predicated region
    $region50: #{tpu_custom_call.1} parent=1 // pred_check
      _
    $region51: #{tpu_custom_call.1} parent=1 // pred_check_branch
      %2124 = sbr.rel (0) target = $region53
    $region52: #{tpu_custom_call.1} parent=1 // pred_region
      %2125 = dma.done [#allocation4], 128
    $region53: #{tpu_custom_call.1} parent=1 // pred_fallthru
      _
    %2126 = vsyncpa [#allocation3], 1
    %2127 = vsyncpa [#allocation6], 1
    %2128 = vsyncpa [#allocation9], 1
    %2129 = vsyncpa [#allocation4], 1

</llo_original>
